<compile_context>
chip_gen: v7x
topology: tpu7x:2x2x1
jax: 0.10.0
libtpu: 0.0.40
codegen_flags: <defaults>
</compile_context>

<pallas_src>
import jax
import jax.numpy as jnp
from jax.experimental import pallas as pl
from jax.experimental.pallas import tpu as pltpu

_EPS = 1e-5
_VMEM_LIMIT = 32 * 1024 * 1024  # safe default on v5e/v6e/v7x; tiles use far less


def _pick_tile_hw(hw):
    """Largest lane-aligned tile that divides H*W."""
    for t in (2048, 1024, 512, 256, 128):
        if hw % t == 0:
            return t
    return hw  # fallback: block dim == full array dim is always legal


def _silu(h):
    # exact SiLU (division lowers to EUP reciprocal + VPU multiply)
    return h * (1.0 / (1.0 + jnp.exp(-h)))


# --------------------------------------------------------------- kernels ----

def _stats1_kernel(x_ref, w1_ref, s_ref, q_ref):
    """Per-tile partial per-channel sum / sum-of-squares of h = W1 @ x.
    (conv1 bias is cancelled by BN1's mean subtraction, so never applied)."""
    x = x_ref[0]                                                    # (Cin, thw)
    h = jnp.dot(w1_ref[...], x, preferred_element_type=jnp.float32)  # (hid, thw)
    s_ref[0, 0] = jnp.sum(h, axis=1, keepdims=True)                 # (hid, 1)
    q_ref[0, 0] = jnp.sum(h * h, axis=1, keepdims=True)


def _stats2_kernel(x_ref, w1s_ref, sh1_ref, w2_ref, s_ref, q_ref):
    """Per-tile partial stats of y = W2 @ silu(bn1(conv1(x))).
    BN1 scale is pre-folded into w1s; only the shift remains in-kernel."""
    x = x_ref[0]
    h = jnp.dot(w1s_ref[...], x, preferred_element_type=jnp.float32) + sh1_ref[...]
    a = _silu(h)
    y = jnp.dot(w2_ref[...], a, preferred_element_type=jnp.float32)  # (Cout, thw)
    s_ref[0, 0] = jnp.sum(y, axis=1, keepdims=True)                  # (Cout, 1)
    q_ref[0, 0] = jnp.sum(y * y, axis=1, keepdims=True)


def _final_kernel(x_ref, w1s_ref, sh1_ref, w2s_ref, sh2_ref, o_ref):
    """Fused conv1 -> BN1 -> SiLU -> conv2 -> BN2 with lane-dense stores.
    Both BN scales are folded into the weights; only shifts applied here."""
    x = x_ref[0]
    h = jnp.dot(w1s_ref[...], x, preferred_element_type=jnp.float32) + sh1_ref[...]
    a = _silu(h)
    y = jnp.dot(w2s_ref[...], a, preferred_element_type=jnp.float32)
    o_ref[0] = (y + sh2_ref[...]).astype(o_ref.dtype)


# --------------------------------------------------------------- wrapper ----

def _param_spec(shape):
    return pl.BlockSpec(shape, lambda n, t, _r=len(shape): (0,) * _r)


def _fold_bn(psum, psumsq, count, gamma, beta):
    """Combine per-tile partials into per-channel scale/shift (f32)."""
    s = jnp.sum(psum, axis=(0, 1))                                  # (C, 1)
    q = jnp.sum(psumsq, axis=(0, 1))                                # (C, 1)
    mean = s / count
    var = jnp.maximum(q / count - mean * mean, 0.0)
    scale = gamma.reshape(-1, 1) * jax.lax.rsqrt(var + _EPS)
    shift = beta.reshape(-1, 1) - mean * scale
    return scale, shift


def conv_encoder_forward(x_nchw, params):
    """x_nchw: (N, Cin, H, W) float32 -> (N, Cout, H, W) float32."""
    w1, b1, g1, be1, w2, b2, g2, be2 = params
    del b1, b2  # conv biases cancel exactly against the BN mean subtraction

    N, Cin, H, W = x_nchw.shape
    hidden = w1.shape[0]
    Cout = w2.shape[0]
    HW = H * W
    thw = _pick_tile_hw(HW)
    T = HW // thw
    P = N * HW

    x3 = x_nchw.reshape(N, Cin, HW)  # free metadata reshape, no transpose

    grid = (N, T)
    cparams = pltpu.CompilerParams(
        dimension_semantics=("parallel", "parallel"),
        vmem_limit_bytes=_VMEM_LIMIT)

    x_spec = pl.BlockSpec((1, Cin, thw), lambda n, t: (n, 0, t))
    out_spec = pl.BlockSpec((1, Cout, thw), lambda n, t: (n, 0, t))

    def stat_spec(c):
        return pl.BlockSpec((1, 1, c, 1), lambda n, t: (n, t, 0, 0))

    # Pass 1: batch statistics of the conv1 output.
    s1, q1 = pl.pallas_call(
        _stats1_kernel,
        out_shape=(jax.ShapeDtypeStruct((N, T, hidden, 1), jnp.float32),
                   jax.ShapeDtypeStruct((N, T, hidden, 1), jnp.float32)),
        grid=grid,
        in_specs=[x_spec, _param_spec((hidden, Cin))],
        out_specs=(stat_spec(hidden), stat_spec(hidden)),
        compiler_params=cparams,
    )(x3, w1)
    sc1, sh1 = _fold_bn(s1, q1, P, g1, be1)
    w1s = w1 * sc1  # fold BN1 scale into conv1 rows (tiny host-side op)

    # Pass 2: batch statistics of the conv2 output.
    s2, q2 = pl.pallas_call(
        _stats2_kernel,
        out_shape=(jax.ShapeDtypeStruct((N, T, Cout, 1), jnp.float32),
                   jax.ShapeDtypeStruct((N, T, Cout, 1), jnp.float32)),
        grid=grid,
        in_specs=[x_spec, _param_spec((hidden, Cin)),
                  _param_spec((hidden, 1)), _param_spec((Cout, hidden))],
        out_specs=(stat_spec(Cout), stat_spec(Cout)),
        compiler_params=cparams,
    )(x3, w1s, sh1, w2)
    sc2, sh2 = _fold_bn(s2, q2, P, g2, be2)
    w2s = w2 * sc2  # fold BN2 scale into conv2 rows

    # Pass 3: fused forward with folded BN, lane-dense output stores.
    y3 = pl.pallas_call(
        _final_kernel,
        out_shape=jax.ShapeDtypeStruct((N, Cout, HW), jnp.float32),
        grid=grid,
        in_specs=[x_spec, _param_spec((hidden, Cin)),
                  _param_spec((hidden, 1)),
                  _param_spec((Cout, hidden)), _param_spec((Cout, 1))],
        out_specs=out_spec,
        compiler_params=cparams,
    )(x3, w1s, sh1, w2s, sh2)

    return y3.reshape(N, Cout, H, W)


# ------------------------------------------------------ params / reference --

def init_params(key, in_channels, out_channels=3):
    hidden = 2 ** (in_channels // out_channels + 5)
    ks = jax.random.split(key, 4)
    # PyTorch-style layouts: 1x1 conv weight as (Cout, Cin).
    w1 = jax.random.normal(ks[0], (hidden, in_channels), jnp.float32) * 0.1
    b1 = jax.random.normal(ks[1], (hidden,), jnp.float32) * 0.1
    w2 = jax.random.normal(ks[2], (out_channels, hidden), jnp.float32) * 0.1
    b2 = jax.random.normal(ks[3], (out_channels,), jnp.float32) * 0.1
    g1 = jnp.ones((hidden,), jnp.float32)
    be1 = jnp.zeros((hidden,), jnp.float32)
    g2 = jnp.ones((out_channels,), jnp.float32)
    be2 = jnp.zeros((out_channels,), jnp.float32)
    return (w1, b1, g1, be1, w2, b2, g2, be2)


def reference_forward(x, params):
    """Pure-JAX reference mirroring the PyTorch module (training-mode BN,
    conv biases included)."""
    w1, b1, g1, be1, w2, b2, g2, be2 = params
    N, Cin, H, W = x.shape
    xf = x.reshape(N, Cin, H * W)
    h = jnp.einsum('oc,ncp->nop', w1, xf) + b1[None, :, None]
    m = h.mean(axis=(0, 2), keepdims=True)
    v = ((h - m) ** 2).mean(axis=(0, 2), keepdims=True)
    h = (h - m) / jnp.sqrt(v + _EPS) * g1[None, :, None] + be1[None, :, None]
    h = h * jax.nn.sigmoid(h)
    y = jnp.einsum('oc,ncp->nop', w2, h) + b2[None, :, None]
    m = y.mean(axis=(0, 2), keepdims=True)
    v = ((y - m) ** 2).mean(axis=(0, 2), keepdims=True)
    y = (y - m) / jnp.sqrt(v + _EPS) * g2[None, :, None] + be2[None, :, None]
    return y.reshape(N, -1, H, W)


if __name__ == "__main__":
    in_channels, out_channels = 4, 3
    N, H, W = 2, 16, 16

    key = jax.random.PRNGKey(0)
    kx, kp = jax.random.split(key)
    x = jax.random.normal(kx, (N, in_channels, H, W), jnp.float32)
    params = init_params(kp, in_channels, out_channels)

    fwd = jax.jit(conv_encoder_forward)
    out = fwd(x, params)
    jax.block_until_ready(out)

    ref = reference_forward(x, params)
    assert out.shape == (N, out_channels, H, W)
    err = float(jnp.max(jnp.abs(out - ref)))
    assert jnp.allclose(out, ref, atol=2e-4, rtol=2e-4), err

    print("KERNEL_OK")
</pallas_src>

<mosaic_0001>
module attributes {stable_mosaic.version = 11 : i64} {
  func.func @_stats1_kernel(%arg0: i32, %arg1: i32, %arg2: memref<1x4x256xf32, #tpu.memory_space<vmem>>, %arg3: memref<64x4xf32, #tpu.memory_space<vmem>>, %arg4: memref<1x1x64x1xf32, #tpu.memory_space<vmem>>, %arg5: memref<1x1x64x1xf32, #tpu.memory_space<vmem>>) attributes {dimension_semantics = [#tpu.dimension_semantics<parallel>, #tpu.dimension_semantics<parallel>], iteration_bounds = array<i64: 2, 1>, scalar_prefetch = 0 : i64, scratch_operands = 0 : i64, tpu.core_type = #tpu.core_type<tc>, window_params = [{transform_indices = @transform_0, window_bounds = array<i64: 1, 4, 256>}, {pipeline_mode = #tpu.pipeline_mode<synchronous>, transform_indices = @transform_1, window_bounds = array<i64: 64, 4>}, {transform_indices = @transform_2, window_bounds = array<i64: 1, 1, 64, 1>}, {transform_indices = @transform_3, window_bounds = array<i64: 1, 1, 64, 1>}]} {
    %c0 = arith.constant 0 : index
    %c0_0 = arith.constant 0 : index
    %c0_1 = arith.constant 0 : index
    %0 = vector.load %arg2[%c0, %c0_0, %c0_1] : memref<1x4x256xf32, #tpu.memory_space<vmem>>, vector<1x4x256xf32>
    %1 = vector.shape_cast %0 : vector<1x4x256xf32> to vector<4x256xf32>
    %c0_2 = arith.constant 0 : index
    %c0_3 = arith.constant 0 : index
    %2 = vector.load %arg3[%c0_2, %c0_3] : memref<64x4xf32, #tpu.memory_space<vmem>>, vector<64x4xf32>
    %cst = arith.constant dense<0.000000e+00> : vector<64x256xf32>
    %3 = tpu.matmul %2, %1, %cst {dimension_numbers = #tpu.dot_dimension_numbers<[1], [0], [0], [1], [0, 0, 1, 1], [], []>} : vector<64x4xf32>, vector<4x256xf32>, vector<64x256xf32> -> vector<64x256xf32>
    %cst_4 = arith.constant dense<0.000000e+00> : vector<64xf32>
    %4 = vector.multi_reduction <add>, %3, %cst_4 [1] : vector<64x256xf32> to vector<64xf32>
    %5 = vector.shape_cast %4 : vector<64xf32> to vector<64x1xf32>
    %c0_5 = arith.constant 0 : index
    %c0_6 = arith.constant 0 : index
    %c0_7 = arith.constant 0 : index
    %c0_8 = arith.constant 0 : index
    %6 = vector.load %arg4[%c0_5, %c0_6, %c0_7, %c0_8] : memref<1x1x64x1xf32, #tpu.memory_space<vmem>>, vector<1x1x64x1xf32>
    %7 = vector.shape_cast %6 : vector<1x1x64x1xf32> to vector<64x1xf32>
    %8 = vector.shape_cast %5 : vector<64x1xf32> to vector<1x1x64x1xf32>
    tpu.vector_store %arg4[%c0_5, %c0_6, %c0_7, %c0_8], %8 {strides = array<i32>} : memref<1x1x64x1xf32, #tpu.memory_space<vmem>>, vector<1x1x64x1xf32>,
    %9 = arith.mulf %3, %3 : vector<64x256xf32>
    %cst_9 = arith.constant dense<0.000000e+00> : vector<64xf32>
    %10 = vector.multi_reduction <add>, %9, %cst_9 [1] : vector<64x256xf32> to vector<64xf32>
    %11 = vector.shape_cast %10 : vector<64xf32> to vector<64x1xf32>
    %c0_10 = arith.constant 0 : index
    %c0_11 = arith.constant 0 : index
    %c0_12 = arith.constant 0 : index
    %c0_13 = arith.constant 0 : index
    %12 = vector.load %arg5[%c0_10, %c0_11, %c0_12, %c0_13] : memref<1x1x64x1xf32, #tpu.memory_space<vmem>>, vector<1x1x64x1xf32>
    %13 = vector.shape_cast %12 : vector<1x1x64x1xf32> to vector<64x1xf32>
    %14 = vector.shape_cast %11 : vector<64x1xf32> to vector<1x1x64x1xf32>
    tpu.vector_store %arg5[%c0_10, %c0_11, %c0_12, %c0_13], %14 {strides = array<i32>} : memref<1x1x64x1xf32, #tpu.memory_space<vmem>>, vector<1x1x64x1xf32>,
    return
  }
  func.func @transform_0(%arg0: i32, %arg1: i32) -> (i32, i32, i32) {
    %c0_i32 = arith.constant 0 : i32
    %c0_i32_0 = arith.constant 0 : i32
    return %arg0, %c0_i32, %arg1 : i32, i32, i32
  }
  func.func @transform_1(%arg0: i32, %arg1: i32) -> (i32, i32) {
    %c0_i32 = arith.constant 0 : i32
    %c0_i32_0 = arith.constant 0 : i32
    %c0_i32_1 = arith.constant 0 : i32
    return %c0_i32, %c0_i32_0 : i32, i32
  }
  func.func @transform_2(%arg0: i32, %arg1: i32) -> (i32, i32, i32, i32) {
    %c0_i32 = arith.constant 0 : i32
    %c0_i32_0 = arith.constant 0 : i32
    %c0_i32_1 = arith.constant 0 : i32
    return %arg0, %arg1, %c0_i32, %c0_i32_0 : i32, i32, i32, i32
  }
  func.func @transform_3(%arg0: i32, %arg1: i32) -> (i32, i32, i32, i32) {
    %c0_i32 = arith.constant 0 : i32
    %c0_i32_0 = arith.constant 0 : i32
    %c0_i32_1 = arith.constant 0 : i32
    return %arg0, %arg1, %c0_i32, %c0_i32_0 : i32, i32, i32, i32
  }
}

module attributes {stable_mosaic.version = 11 : i64} {
  func.func @_stats2_kernel(%arg0: i32, %arg1: i32, %arg2: memref<1x4x256xf32, #tpu.memory_space<vmem>>, %arg3: memref<64x4xf32, #tpu.memory_space<vmem>>, %arg4: memref<64x1xf32, #tpu.memory_space<vmem>>, %arg5: memref<3x64xf32, #tpu.memory_space<vmem>>, %arg6: memref<1x1x3x1xf32, #tpu.memory_space<vmem>>, %arg7: memref<1x1x3x1xf32, #tpu.memory_space<vmem>>) attributes {dimension_semantics = [#tpu.dimension_semantics<parallel>, #tpu.dimension_semantics<parallel>], iteration_bounds = array<i64: 2, 1>, scalar_prefetch = 0 : i64, scratch_operands = 0 : i64, tpu.core_type = #tpu.core_type<tc>, window_params = [{transform_indices = @transform_0, window_bounds = array<i64: 1, 4, 256>}, {pipeline_mode = #tpu.pipeline_mode<synchronous>, transform_indices = @transform_1, window_bounds = array<i64: 64, 4>}, {pipeline_mode = #tpu.pipeline_mode<synchronous>, transform_indices = @transform_2, window_bounds = array<i64: 64, 1>}, {pipeline_mode = #tpu.pipeline_mode<synchronous>, transform_indices = @transform_3, window_bounds = array<i64: 3, 64>}, {transform_indices = @transform_4, window_bounds = array<i64: 1, 1, 3, 1>}, {transform_indices = @transform_5, window_bounds = array<i64: 1, 1, 3, 1>}]} {
    %c0 = arith.constant 0 : index
    %c0_0 = arith.constant 0 : index
    %c0_1 = arith.constant 0 : index
    %0 = vector.load %arg2[%c0, %c0_0, %c0_1] : memref<1x4x256xf32, #tpu.memory_space<vmem>>, vector<1x4x256xf32>
    %1 = vector.shape_cast %0 : vector<1x4x256xf32> to vector<4x256xf32>
    %c0_2 = arith.constant 0 : index
    %c0_3 = arith.constant 0 : index
    %2 = vector.load %arg3[%c0_2, %c0_3] : memref<64x4xf32, #tpu.memory_space<vmem>>, vector<64x4xf32>
    %cst = arith.constant dense<0.000000e+00> : vector<64x256xf32>
    %3 = tpu.matmul %2, %1, %cst {dimension_numbers = #tpu.dot_dimension_numbers<[1], [0], [0], [1], [0, 0, 1, 1], [], []>} : vector<64x4xf32>, vector<4x256xf32>, vector<64x256xf32> -> vector<64x256xf32>
    %c0_4 = arith.constant 0 : index
    %c0_5 = arith.constant 0 : index
    %4 = vector.load %arg4[%c0_4, %c0_5] : memref<64x1xf32, #tpu.memory_space<vmem>>, vector<64x1xf32>
    %5 = vector.broadcast %4 : vector<64x1xf32> to vector<64x256xf32>
    %6 = arith.addf %3, %5 : vector<64x256xf32>
    %cst_6 = arith.constant 0.000000e+00 : f32
    %7 = vector.broadcast %cst_6 : f32 to vector<64x256xf32>
    %8 = arith.subf %7, %6 : vector<64x256xf32>
    %9 = math.exp %8 : vector<64x256xf32>
    %cst_7 = arith.constant 1.000000e+00 : f32
    %10 = vector.broadcast %cst_7 : f32 to vector<64x256xf32>
    %11 = arith.addf %10, %9 : vector<64x256xf32>
    %cst_8 = arith.constant 1.000000e+00 : f32
    %12 = vector.broadcast %cst_8 : f32 to vector<64x256xf32>
    %13 = arith.divf %12, %11 : vector<64x256xf32>
    %14 = arith.mulf %6, %13 : vector<64x256xf32>
    %c0_9 = arith.constant 0 : index
    %c0_10 = arith.constant 0 : index
    %15 = vector.load %arg5[%c0_9, %c0_10] : memref<3x64xf32, #tpu.memory_space<vmem>>, vector<3x64xf32>
    %cst_11 = arith.constant dense<0.000000e+00> : vector<3x256xf32>
    %16 = tpu.matmul %15, %14, %cst_11 {dimension_numbers = #tpu.dot_dimension_numbers<[1], [0], [0], [1], [0, 0, 1, 1], [], []>} : vector<3x64xf32>, vector<64x256xf32>, vector<3x256xf32> -> vector<3x256xf32>
    %cst_12 = arith.constant dense<0.000000e+00> : vector<3xf32>
    %17 = vector.multi_reduction <add>, %16, %cst_12 [1] : vector<3x256xf32> to vector<3xf32>
    %18 = vector.shape_cast %17 : vector<3xf32> to vector<3x1xf32>
    %c0_13 = arith.constant 0 : index
    %c0_14 = arith.constant 0 : index
    %c0_15 = arith.constant 0 : index
    %c0_16 = arith.constant 0 : index
    %19 = vector.load %arg6[%c0_13, %c0_14, %c0_15, %c0_16] : memref<1x1x3x1xf32, #tpu.memory_space<vmem>>, vector<1x1x3x1xf32>
    %20 = vector.shape_cast %19 : vector<1x1x3x1xf32> to vector<3x1xf32>
    %21 = vector.shape_cast %18 : vector<3x1xf32> to vector<1x1x3x1xf32>
    tpu.vector_store %arg6[%c0_13, %c0_14, %c0_15, %c0_16], %21 {strides = array<i32>} : memref<1x1x3x1xf32, #tpu.memory_space<vmem>>, vector<1x1x3x1xf32>,
    %22 = arith.mulf %16, %16 : vector<3x256xf32>
    %cst_17 = arith.constant dense<0.000000e+00> : vector<3xf32>
    %23 = vector.multi_reduction <add>, %22, %cst_17 [1] : vector<3x256xf32> to vector<3xf32>
    %24 = vector.shape_cast %23 : vector<3xf32> to vector<3x1xf32>
    %c0_18 = arith.constant 0 : index
    %c0_19 = arith.constant 0 : index
    %c0_20 = arith.constant 0 : index
    %c0_21 = arith.constant 0 : index
    %25 = vector.load %arg7[%c0_18, %c0_19, %c0_20, %c0_21] : memref<1x1x3x1xf32, #tpu.memory_space<vmem>>, vector<1x1x3x1xf32>
    %26 = vector.shape_cast %25 : vector<1x1x3x1xf32> to vector<3x1xf32>
    %27 = vector.shape_cast %24 : vector<3x1xf32> to vector<1x1x3x1xf32>
    tpu.vector_store %arg7[%c0_18, %c0_19, %c0_20, %c0_21], %27 {strides = array<i32>} : memref<1x1x3x1xf32, #tpu.memory_space<vmem>>, vector<1x1x3x1xf32>,
    return
  }
  func.func @transform_0(%arg0: i32, %arg1: i32) -> (i32, i32, i32) {
    %c0_i32 = arith.constant 0 : i32
    %c0_i32_0 = arith.constant 0 : i32
    return %arg0, %c0_i32, %arg1 : i32, i32, i32
  }
  func.func @transform_1(%arg0: i32, %arg1: i32) -> (i32, i32) {
    %c0_i32 = arith.constant 0 : i32
    %c0_i32_0 = arith.constant 0 : i32
    %c0_i32_1 = arith.constant 0 : i32
    return %c0_i32, %c0_i32_0 : i32, i32
  }
  func.func @transform_2(%arg0: i32, %arg1: i32) -> (i32, i32) {
    %c0_i32 = arith.constant 0 : i32
    %c0_i32_0 = arith.constant 0 : i32
    %c0_i32_1 = arith.constant 0 : i32
    return %c0_i32, %c0_i32_0 : i32, i32
  }
  func.func @transform_3(%arg0: i32, %arg1: i32) -> (i32, i32) {
    %c0_i32 = arith.constant 0 : i32
    %c0_i32_0 = arith.constant 0 : i32
    %c0_i32_1 = arith.constant 0 : i32
    return %c0_i32, %c0_i32_0 : i32, i32
  }
  func.func @transform_4(%arg0: i32, %arg1: i32) -> (i32, i32, i32, i32) {
    %c0_i32 = arith.constant 0 : i32
    %c0_i32_0 = arith.constant 0 : i32
    %c0_i32_1 = arith.constant 0 : i32
    return %arg0, %arg1, %c0_i32, %c0_i32_0 : i32, i32, i32, i32
  }
  func.func @transform_5(%arg0: i32, %arg1: i32) -> (i32, i32, i32, i32) {
    %c0_i32 = arith.constant 0 : i32
    %c0_i32_0 = arith.constant 0 : i32
    %c0_i32_1 = arith.constant 0 : i32
    return %arg0, %arg1, %c0_i32, %c0_i32_0 : i32, i32, i32, i32
  }
}

module attributes {stable_mosaic.version = 11 : i64} {
  func.func @_final_kernel(%arg0: i32, %arg1: i32, %arg2: memref<1x4x256xf32, #tpu.memory_space<vmem>>, %arg3: memref<64x4xf32, #tpu.memory_space<vmem>>, %arg4: memref<64x1xf32, #tpu.memory_space<vmem>>, %arg5: memref<3x64xf32, #tpu.memory_space<vmem>>, %arg6: memref<3x1xf32, #tpu.memory_space<vmem>>, %arg7: memref<1x3x256xf32, #tpu.memory_space<vmem>>) attributes {dimension_semantics = [#tpu.dimension_semantics<parallel>, #tpu.dimension_semantics<parallel>], iteration_bounds = array<i64: 2, 1>, scalar_prefetch = 0 : i64, scratch_operands = 0 : i64, tpu.core_type = #tpu.core_type<tc>, window_params = [{transform_indices = @transform_0, window_bounds = array<i64: 1, 4, 256>}, {pipeline_mode = #tpu.pipeline_mode<synchronous>, transform_indices = @transform_1, window_bounds = array<i64: 64, 4>}, {pipeline_mode = #tpu.pipeline_mode<synchronous>, transform_indices = @transform_2, window_bounds = array<i64: 64, 1>}, {pipeline_mode = #tpu.pipeline_mode<synchronous>, transform_indices = @transform_3, window_bounds = array<i64: 3, 64>}, {pipeline_mode = #tpu.pipeline_mode<synchronous>, transform_indices = @transform_4, window_bounds = array<i64: 3, 1>}, {transform_indices = @transform_5, window_bounds = array<i64: 1, 3, 256>}]} {
    %c0 = arith.constant 0 : index
    %c0_0 = arith.constant 0 : index
    %c0_1 = arith.constant 0 : index
    %0 = vector.load %arg2[%c0, %c0_0, %c0_1] : memref<1x4x256xf32, #tpu.memory_space<vmem>>, vector<1x4x256xf32>
    %1 = vector.shape_cast %0 : vector<1x4x256xf32> to vector<4x256xf32>
    %c0_2 = arith.constant 0 : index
    %c0_3 = arith.constant 0 : index
    %2 = vector.load %arg3[%c0_2, %c0_3] : memref<64x4xf32, #tpu.memory_space<vmem>>, vector<64x4xf32>
    %cst = arith.constant dense<0.000000e+00> : vector<64x256xf32>
    %3 = tpu.matmul %2, %1, %cst {dimension_numbers = #tpu.dot_dimension_numbers<[1], [0], [0], [1], [0, 0, 1, 1], [], []>} : vector<64x4xf32>, vector<4x256xf32>, vector<64x256xf32> -> vector<64x256xf32>
    %c0_4 = arith.constant 0 : index
    %c0_5 = arith.constant 0 : index
    %4 = vector.load %arg4[%c0_4, %c0_5] : memref<64x1xf32, #tpu.memory_space<vmem>>, vector<64x1xf32>
    %5 = vector.broadcast %4 : vector<64x1xf32> to vector<64x256xf32>
    %6 = arith.addf %3, %5 : vector<64x256xf32>
    %cst_6 = arith.constant 0.000000e+00 : f32
    %7 = vector.broadcast %cst_6 : f32 to vector<64x256xf32>
    %8 = arith.subf %7, %6 : vector<64x256xf32>
    %9 = math.exp %8 : vector<64x256xf32>
    %cst_7 = arith.constant 1.000000e+00 : f32
    %10 = vector.broadcast %cst_7 : f32 to vector<64x256xf32>
    %11 = arith.addf %10, %9 : vector<64x256xf32>
    %cst_8 = arith.constant 1.000000e+00 : f32
    %12 = vector.broadcast %cst_8 : f32 to vector<64x256xf32>
    %13 = arith.divf %12, %11 : vector<64x256xf32>
    %14 = arith.mulf %6, %13 : vector<64x256xf32>
    %c0_9 = arith.constant 0 : index
    %c0_10 = arith.constant 0 : index
    %15 = vector.load %arg5[%c0_9, %c0_10] : memref<3x64xf32, #tpu.memory_space<vmem>>, vector<3x64xf32>
    %cst_11 = arith.constant dense<0.000000e+00> : vector<3x256xf32>
    %16 = tpu.matmul %15, %14, %cst_11 {dimension_numbers = #tpu.dot_dimension_numbers<[1], [0], [0], [1], [0, 0, 1, 1], [], []>} : vector<3x64xf32>, vector<64x256xf32>, vector<3x256xf32> -> vector<3x256xf32>
    %c0_12 = arith.constant 0 : index
    %c0_13 = arith.constant 0 : index
    %17 = vector.load %arg6[%c0_12, %c0_13] : memref<3x1xf32, #tpu.memory_space<vmem>>, vector<3x1xf32>
    %18 = vector.broadcast %17 : vector<3x1xf32> to vector<3x256xf32>
    %19 = arith.addf %16, %18 : vector<3x256xf32>
    %c0_14 = arith.constant 0 : index
    %c0_15 = arith.constant 0 : index
    %c0_16 = arith.constant 0 : index
    %20 = vector.load %arg7[%c0_14, %c0_15, %c0_16] : memref<1x3x256xf32, #tpu.memory_space<vmem>>, vector<1x3x256xf32>
    %21 = vector.shape_cast %20 : vector<1x3x256xf32> to vector<3x256xf32>
    %22 = vector.shape_cast %19 : vector<3x256xf32> to vector<1x3x256xf32>
    tpu.vector_store %arg7[%c0_14, %c0_15, %c0_16], %22 {strides = array<i32>} : memref<1x3x256xf32, #tpu.memory_space<vmem>>, vector<1x3x256xf32>,
    return
  }
  func.func @transform_0(%arg0: i32, %arg1: i32) -> (i32, i32, i32) {
    %c0_i32 = arith.constant 0 : i32
    %c0_i32_0 = arith.constant 0 : i32
    return %arg0, %c0_i32, %arg1 : i32, i32, i32
  }
  func.func @transform_1(%arg0: i32, %arg1: i32) -> (i32, i32) {
    %c0_i32 = arith.constant 0 : i32
    %c0_i32_0 = arith.constant 0 : i32
    %c0_i32_1 = arith.constant 0 : i32
    return %c0_i32, %c0_i32_0 : i32, i32
  }
  func.func @transform_2(%arg0: i32, %arg1: i32) -> (i32, i32) {
    %c0_i32 = arith.constant 0 : i32
    %c0_i32_0 = arith.constant 0 : i32
    %c0_i32_1 = arith.constant 0 : i32
    return %c0_i32, %c0_i32_0 : i32, i32
  }
  func.func @transform_3(%arg0: i32, %arg1: i32) -> (i32, i32) {
    %c0_i32 = arith.constant 0 : i32
    %c0_i32_0 = arith.constant 0 : i32
    %c0_i32_1 = arith.constant 0 : i32
    return %c0_i32, %c0_i32_0 : i32, i32
  }
  func.func @transform_4(%arg0: i32, %arg1: i32) -> (i32, i32) {
    %c0_i32 = arith.constant 0 : i32
    %c0_i32_0 = arith.constant 0 : i32
    %c0_i32_1 = arith.constant 0 : i32
    return %c0_i32, %c0_i32_0 : i32, i32
  }
  func.func @transform_5(%arg0: i32, %arg1: i32) -> (i32, i32, i32) {
    %c0_i32 = arith.constant 0 : i32
    %c0_i32_0 = arith.constant 0 : i32
    return %arg0, %c0_i32, %arg1 : i32, i32, i32
  }
}

</mosaic_0001>

<llo_original>
// kernel: conv_encoder_forward.3
$region0: #{conv_encoder_forward.3}
  #allocation0 [shape = 'u32[]', space=smem, size = 0x4, offset = 0x4, fixed_abs, tag = 'smem constant byte address 0x4 - core index']
  #allocation1 [shape = 'u32[144,128]{1,0:T(1,128)}', space=vmem, size = 0x12000, scoped, tag = 'internal scratch']
  %s0 = inlined_call_operand.vmem [shape: f32[2,4,256], index: 0, kind: input, shape index: {}]
  %s1 = inlined_call_operand.vmem [shape: f32[64,4], index: 1, kind: input, shape index: {}]
  %s2 = inlined_call_operand.vmem [shape: f32[2,1,64,1], index: 2, kind: output, shape index: {0}]
  %s3 = inlined_call_operand.vmem [shape: f32[2,1,64,1], index: 3, kind: output, shape index: {1}]
  %4 = xla_tuple %s2, %s3
  %s5 = sld [smem:[#allocation0]]
  $region49: #{conv_encoder_forward.3} parent=0
    _
  %s7 = ssub.s32 1, %s5
  %s8 = scalar_select 0, %s7, %s5
  loop: start=0, step=1, limit=4
  $region2: #{conv_encoder_forward.3} parent=0 // loop_pre_header
    _
  $region3: #{conv_encoder_forward.3} parent=0 // loop_header
    %s10 = sphi 0, %s14
    %p11 = scmp.ge.s32.totalorder %s10, 4
    %s17 = sphi 0, %s29
    %s18 = sphi 0, %s25
    %s19 = sphi 0, %s17
    %s20 = sphi 0, %s18
    %s21 = sphi 0, %s19
    %s22 = sphi 0, %s20
    %s34 = sphi 0, %s36
    %s37 = sphi 0, %s34
    %s38 = sphi 0, %s37
    %s54 = sphi 0, %s38
    %s58 = sphi 0, %s58
    %s60 = sphi 0, %s58
    %s61 = sphi 0, %s60
    %s75 = sphi 0, %s61
    %s83 = sphi 0, %s85
    %s86 = sphi 0, %s83
    %s87 = sphi 0, %s86
    %s103 = sphi 0, %s87
    %s111 = sphi 0, %s113
    %s114 = sphi 0, %s111
    %s115 = sphi 0, %s114
    %s131 = sphi 0, %s115
  $region4: #{conv_encoder_forward.3} parent=0 // loop_header_branch
    %13 = sbr.rel (%p11) target = $region8
  $region5: #{conv_encoder_forward.3} parent=0 // loop_body
    %s15 = ssub.s32 %s10, 1
    %s16 = ssub.s32 %s10, 2
    %s23 = sadd.s32 1, %s18
    %p24 = scmp.ge.s32.totalorder %s23, 1
    %s25 = scalar_select %p24, 0, %s23
    %s26 = sadd.s32 1, %s17
    %s27 = scalar_select %p24, %s26, %s17
    %p28 = scmp.ge.s32.totalorder %s27, 2
    %s29 = scalar_select %p28, 0, %s27
    %s30 = ssub.s32 %s17, %s29
    %s31 = ssub.s32 %s18, %s25
    %s32 = sor.u32 %s30, %s31
    %p33 = scmp.eq.s32.totalorder %s32, 0
    %s35 = sadd.s32 %s34, 1
    %s36 = scalar_select %p33, %s34, %s35
    %p39 = pneg %p33
    %p40 = scmp.eq.s32.totalorder %s10, 1
    %p41 = por %p39, %p40
    %p42 = scmp.ne.s32.totalorder %s34, %s37
    %p43 = scmp.eq.s32.totalorder %s10, 0
    %p44 = por %p42, %p43
    %p45 = scmp.ne.s32.totalorder %s34, %s37
    %p46 = scmp.eq.s32.totalorder %s15, 1
    %p47 = por %p45, %p46
    %p48 = scmp.ne.s32.totalorder %s37, %s38
    %p49 = scmp.eq.s32.totalorder %s15, 0
    %p50 = por %p48, %p49
    %p51 = scmp.ne.s32.totalorder %s37, %s38
    %p52 = scmp.eq.s32.totalorder %s16, 1
    %p53 = por %p51, %p52
    %p55 = scmp.ne.s32.totalorder %s38, %s54
    %p56 = scmp.eq.s32.totalorder %s16, 0
    %p57 = por %p55, %p56
    %s59 = sadd.s32 %s58, 1
    %p62 = scmp.eq.s32.totalorder %s10, 1
    %p63 = scmp.ne.s32.totalorder %s58, %s60
    %p64 = scmp.eq.s32.totalorder %s10, 0
    %p65 = por %p63, %p64
    %p66 = scmp.ne.s32.totalorder %s58, %s60
    %p67 = scmp.eq.s32.totalorder %s15, 1
    %p68 = por %p66, %p67
    %p69 = scmp.ne.s32.totalorder %s60, %s61
    %p70 = scmp.eq.s32.totalorder %s15, 0
    %p71 = por %p69, %p70
    %p72 = scmp.ne.s32.totalorder %s60, %s61
    %p73 = scmp.eq.s32.totalorder %s16, 1
    %p74 = por %p72, %p73
    %p76 = scmp.ne.s32.totalorder %s61, %s75
    %p77 = scmp.eq.s32.totalorder %s16, 0
    %p78 = por %p76, %p77
    %s79 = ssub.s32 %s17, %s29
    %s80 = ssub.s32 %s18, %s25
    %s81 = sor.u32 %s79, %s80
    %p82 = scmp.eq.s32.totalorder %s81, 0
    %s84 = sadd.s32 %s83, 1
    %s85 = scalar_select %p82, %s83, %s84
    %p88 = pneg %p82
    %p89 = scmp.eq.s32.totalorder %s10, 1
    %p90 = por %p88, %p89
    %p91 = scmp.ne.s32.totalorder %s83, %s86
    %p92 = scmp.eq.s32.totalorder %s10, 0
    %p93 = por %p91, %p92
    %p94 = scmp.ne.s32.totalorder %s83, %s86
    %p95 = scmp.eq.s32.totalorder %s15, 1
    %p96 = por %p94, %p95
    %p97 = scmp.ne.s32.totalorder %s86, %s87
    %p98 = scmp.eq.s32.totalorder %s15, 0
    %p99 = por %p97, %p98
    %p100 = scmp.ne.s32.totalorder %s86, %s87
    %p101 = scmp.eq.s32.totalorder %s16, 1
    %p102 = por %p100, %p101
    %p104 = scmp.ne.s32.totalorder %s87, %s103
    %p105 = scmp.eq.s32.totalorder %s16, 0
    %p106 = por %p104, %p105
    %s107 = ssub.s32 %s17, %s29
    %s108 = ssub.s32 %s18, %s25
    %s109 = sor.u32 %s107, %s108
    %p110 = scmp.eq.s32.totalorder %s109, 0
    %s112 = sadd.s32 %s111, 1
    %s113 = scalar_select %p110, %s111, %s112
    %p116 = pneg %p110
    %p117 = scmp.eq.s32.totalorder %s10, 1
    %p118 = por %p116, %p117
    %p119 = scmp.ne.s32.totalorder %s111, %s114
    %p120 = scmp.eq.s32.totalorder %s10, 0
    %p121 = por %p119, %p120
    %p122 = scmp.ne.s32.totalorder %s111, %s114
    %p123 = scmp.eq.s32.totalorder %s15, 1
    %p124 = por %p122, %p123
    %p125 = scmp.ne.s32.totalorder %s114, %s115
    %p126 = scmp.eq.s32.totalorder %s15, 0
    %p127 = por %p125, %p126
    %p128 = scmp.ne.s32.totalorder %s114, %s115
    %p129 = scmp.eq.s32.totalorder %s16, 1
    %p130 = por %p128, %p129
    %p132 = scmp.ne.s32.totalorder %s115, %s131
    %p133 = scmp.eq.s32.totalorder %s16, 0
    %p134 = por %p132, %p133
    %p135 = scmp.le.s32.totalorder 1, %s10
    %p136 = scmp.lt.s32.totalorder %s10, 3
    %p137 = pnand %p135, %p136
    %p138 = pneg %p137
    // Predicated region
    $region9: #{conv_encoder_forward.3} parent=5 // pred_check
      _
    $region10: #{conv_encoder_forward.3} parent=5 // pred_check_branch
      %140 = sbr.rel (%p137) target = $region12
    $region11: #{conv_encoder_forward.3} parent=5 // pred_region
      %s141 = ssub.s32 %s10, 1
      // Predicated region
      $region13: #{conv_encoder_forward.3} parent=11 // pred_check
        %p142 = pneg %p71
      $region14: #{conv_encoder_forward.3} parent=11 // pred_check_branch
        %144 = sbr.rel (%p142) target = $region16
      $region15: #{conv_encoder_forward.3} parent=11 // pred_region
        _
      $region16: #{conv_encoder_forward.3} parent=11 // pred_fallthru
        _
    $region12: #{conv_encoder_forward.3} parent=5 // pred_fallthru
      _
    %p145 = scmp.lt.s32.totalorder %s10, 2
    // Predicated region
    $region17: #{conv_encoder_forward.3} parent=5 // pred_check
      %p146 = pneg %p145
    $region18: #{conv_encoder_forward.3} parent=5 // pred_check_branch
      %148 = sbr.rel (%p146) target = $region20
    $region19: #{conv_encoder_forward.3} parent=5 // pred_region
      // Predicated region
      $region21: #{conv_encoder_forward.3} parent=19 // pred_check
        %p149 = pneg %p44
      $region22: #{conv_encoder_forward.3} parent=19 // pred_check_branch
        %151 = sbr.rel (%p149) target = $region24
      $region23: #{conv_encoder_forward.3} parent=19 // pred_region
        %s152 = smul.u32 2, %s18
        %p153 = scmp.lt.s32.totalorder %s17, 1
        %s154 = scalar_select %p153, %s17, 1
        %p155 = scmp.lt.s32.totalorder %s152, 1
        %s156 = scalar_select %p155, %s152, 1
        %s157 = smul.addr %s154, 2
        %s158 = sadd.s32 %s156, %s157
        %s159 = smul.addr %s158, 4
        %s160 = scalar_lea.vmem %s0, %s159
        %s161 = smul.u32 2, %s18
      $region24: #{conv_encoder_forward.3} parent=19 // pred_fallthru
        _
    $region20: #{conv_encoder_forward.3} parent=5 // pred_fallthru
      _
    %p162 = scmp.le.s32.totalorder 1, %s10
    %p163 = scmp.lt.s32.totalorder %s10, 3
    %p164 = pnand %p162, %p163
    %p165 = pneg %p164
    // Predicated region
    $region25: #{conv_encoder_forward.3} parent=5 // pred_check
      _
    $region26: #{conv_encoder_forward.3} parent=5 // pred_check_branch
      %167 = sbr.rel (%p164) target = $region28
    $region27: #{conv_encoder_forward.3} parent=5 // pred_region
      %s168 = ssub.s32 %s10, 1
      %s169 = smul.u32 2, %s20
      %p170 = scmp.lt.s32.totalorder %s19, 1
      %s171 = scalar_select %p170, %s19, 1
      %p172 = scmp.lt.s32.totalorder %s169, 1
      %s173 = scalar_select %p172, %s169, 1
      %s174 = smul.addr %s171, 2
      %s175 = sadd.s32 %s173, %s174
      %s176 = smul.addr %s175, 4
      %s177 = scalar_lea.vmem %s0, %s176
      %p178 = pneg %p50
      %p179 = pneg %p47
      %p180 = pneg %p71
      %p181 = pneg %p68
      %p182 = pneg %p99
      %p183 = pneg %p96
      %p184 = scmp.lt.s32.totalorder %s19, 1
      %s185 = scalar_select %p184, %s19, 1
      %p186 = scmp.lt.s32.totalorder %s20, 0
      %s187 = scalar_select %p186, %s20, 0
      %s188 = smul.addr %s187, 8
      %s189 = smul.addr %s185, 8
      %s190 = sadd.s32 %s188, %s189
      %s191 = smul.addr %s190, 8
      %s192 = scalar_lea.vmem %s2, %s191
      %p193 = pneg %p127
      %p194 = pneg %p124
      %p195 = scmp.lt.s32.totalorder %s19, 1
      %s196 = scalar_select %p195, %s19, 1
      %p197 = scmp.lt.s32.totalorder %s20, 0
      %s198 = scalar_select %p197, %s20, 0
      %s199 = smul.addr %s198, 8
      %s200 = smul.addr %s196, 8
      %s201 = sadd.s32 %s199, %s200
      %s202 = smul.addr %s201, 8
      %s203 = scalar_lea.vmem %s3, %s202
      %s204 = smul.u32 2, %s20
      %p205 = scmp.lt.s32.totalorder %s19, 1
      %s206 = scalar_select %p205, %s19, 1
      %p207 = scmp.lt.s32.totalorder %s204, 1
      %s208 = scalar_select %p207, %s204, 1
      %s209 = smul.addr %s206, 2
      %s210 = sadd.s32 %s208, %s209
      %s211 = smul.addr %s210, 4
      %s212 = scalar_lea.vmem %s0, %s211
      %s213 = smul.u32 2, %s20
      %p214 = scmp.lt.s32.totalorder %s19, 1
      %s215 = scalar_select %p214, %s19, 1
      %p216 = scmp.lt.s32.totalorder %s20, 0
      %s217 = scalar_select %p216, %s20, 0
      %s218 = smul.addr %s217, 8
      %s219 = smul.addr %s215, 8
      %s220 = sadd.s32 %s218, %s219
      %s221 = smul.addr %s220, 8
      %s222 = scalar_lea.vmem %s2, %s221
      %p223 = scmp.lt.s32.totalorder %s19, 1
      %s224 = scalar_select %p223, %s19, 1
      %p225 = scmp.lt.s32.totalorder %s20, 0
      %s226 = scalar_select %p225, %s20, 0
      %s227 = smul.addr %s226, 8
      %s228 = smul.addr %s224, 8
      %s229 = sadd.s32 %s227, %s228
      %s230 = smul.addr %s229, 8
      %s231 = scalar_lea.vmem %s3, %s230
      %v232 = vld [vmem:[%s212] sm:$0xff]
      %v233 = vld [vmem:[%s1] sm:$0xff]
      %v234 = vld [vmem:[%s1 + $0x8] sm:$0xff]
      %v235 = vld [vmem:[%s1 + $0x10] sm:$0xff]
      %v236 = vld [vmem:[%s1 + $0x18] sm:$0xff]
      %v237 = vld [vmem:[%s1 + $0x20] sm:$0xff]
      %v238 = vld [vmem:[%s1 + $0x28] sm:$0xff]
      %v239 = vld [vmem:[%s1 + $0x30] sm:$0xff]
      %v240 = vld [vmem:[%s1 + $0x38] sm:$0xff]
      %v242 = vcombine.high %v232, %v232
      %vm243 = vcmask 31744
      %v245 = vsel %vm243, %v233, 0
      %v248 = vsel %vm243, %v234, 0
      %v251 = vsel %vm243, %v235, 0
      %v254 = vsel %vm243, %v236, 0
      %v257 = vsel %vm243, %v237, 0
      %v260 = vsel %vm243, %v238, 0
      %v263 = vsel %vm243, %v239, 0
      %v266 = vsel %vm243, %v240, 0
      %vm268 = vcmask 1043456
      %v269 = vsel %vm268, %v232, 0
      %v271 = vsel %vm268, %v242, 0
      %273 = vmatprep.subr.mxu0 %v271
      %274 = vmatpush1.msra.mxu0 %v269
      %275 = vmatprep.subr.mxu0 0.0
      %276 = vmatpush1.msra.mxu0 0.0
      %277 = vmatprep.subr.mxu0 0.0
      %278 = vmatpush1.msra.mxu0 0.0
      %279 = vmatprep.subr.mxu0 0.0
      %280 = vmatpush1.msra.mxu0 0.0
      %281 = vmatprep.subr.mxu0 0.0
      %282 = vmatpush1.msra.mxu0 0.0
      %283 = vmatprep.subr.mxu0 0.0
      %284 = vmatpush1.msra.mxu0 0.0
      %285 = vmatprep.subr.mxu0 0.0
      %286 = vmatpush1.msra.mxu0 0.0
      %287 = vmatprep.subr.mxu0 0.0
      %288 = vmatpush1.msra.mxu0 0.0
      %289 = vmatprep.subr.mxu0 0.0
      %290 = vmatpush1.msra.mxu0 0.0
      %291 = vmatprep.subr.mxu0 0.0
      %292 = vmatpush1.msra.mxu0 0.0
      %293 = vmatprep.subr.mxu0 0.0
      %294 = vmatpush1.msra.mxu0 0.0
      %295 = vmatprep.subr.mxu0 0.0
      %296 = vmatpush1.msra.mxu0 0.0
      %297 = vmatprep.subr.mxu0 0.0
      %298 = vmatpush1.msra.mxu0 0.0
      %299 = vmatprep.subr.mxu0 0.0
      %300 = vmatpush1.msra.mxu0 0.0
      %301 = vmatprep.subr.mxu0 0.0
      %302 = vmatpush1.msra.mxu0 0.0
      %303 = vmatprep.subr.mxu0 0.0
      %304 = vmatpush1.msra.mxu0 0.0
      %305 = vmatprep.subr.mxu0 0.0
      %306 = vmatpush1.msra.mxu0 0.0
      %307 = vmatprep.subr.mxu0 0.0
      %308 = vmatpush1.msra.mxu0 0.0
      %309 = vmatprep.subr.mxu0 0.0
      %310 = vmatpush1.msra.mxu0 0.0
      %311 = vmatprep.subr.mxu0 0.0
      %312 = vmatpush1.msra.mxu0 0.0
      %313 = vmatprep.subr.mxu0 0.0
      %314 = vmatpush1.msra.mxu0 0.0
      %315 = vmatprep.subr.mxu0 0.0
      %316 = vmatpush1.msra.mxu0 0.0
      %317 = vmatprep.subr.mxu0 0.0
      %318 = vmatpush1.msra.mxu0 0.0
      %319 = vmatprep.subr.mxu0 0.0
      %320 = vmatpush1.msra.mxu0 0.0
      %321 = vmatprep.subr.mxu0 0.0
      %322 = vmatpush1.msra.mxu0 0.0
      %323 = vmatprep.subr.mxu0 0.0
      %324 = vmatpush1.msra.mxu0 0.0
      %325 = vmatprep.subr.mxu0 0.0
      %326 = vmatpush1.msra.mxu0 0.0
      %327 = vmatprep.subr.mxu0 0.0
      %328 = vmatpush1.msra.mxu0 0.0
      %329 = vmatprep.subr.mxu0 0.0
      %330 = vmatpush1.msra.mxu0 0.0
      %331 = vmatprep.subr.mxu0 0.0
      %332 = vmatpush1.msra.mxu0 0.0
      %333 = vmatprep.subr.mxu0 0.0
      %334 = vmatpush1.msra.mxu0 0.0
      %335 = vmatprep.subr.mxu0 0.0
      %336 = vmatpush1.msra.mxu0 0.0
      %337 = vmatprep.mubr.f32.mxu0 0.0
      %338 = vmatmul.mubr.f32.gmra.mrb[0].mxu0 %v245
      %v339 = vpop.f32.mrb[0].mxu0
      %v340 = vadd.f32 0.0, %v339
      %v341 = vpop.f32.mrb[0].mxu0
      %v342 = vadd.f32 0.0, %v341
      %343 = vmatprep.mubr.f32.mxu0 0.0
      %344 = vmatmul.mubr.f32.gmra.mrb[0].mxu0 %v248
      %v345 = vpop.f32.mrb[0].mxu0
      %v346 = vadd.f32 0.0, %v345
      %v347 = vpop.f32.mrb[0].mxu0
      %v348 = vadd.f32 0.0, %v347
      %349 = vmatprep.mubr.f32.mxu0 0.0
      %350 = vmatmul.mubr.f32.gmra.mrb[0].mxu0 %v251
      %v351 = vpop.f32.mrb[0].mxu0
      %v352 = vadd.f32 0.0, %v351
      %v353 = vpop.f32.mrb[0].mxu0
      %v354 = vadd.f32 0.0, %v353
      %355 = vmatprep.mubr.f32.mxu0 0.0
      %356 = vmatmul.mubr.f32.gmra.mrb[0].mxu0 %v254
      %v357 = vpop.f32.mrb[0].mxu0
      %v358 = vadd.f32 0.0, %v357
      %v359 = vpop.f32.mrb[0].mxu0
      %v360 = vadd.f32 0.0, %v359
      %361 = vmatprep.mubr.f32.mxu0 0.0
      %362 = vmatmul.mubr.f32.gmra.mrb[0].mxu0 %v257
      %v363 = vpop.f32.mrb[0].mxu0
      %v364 = vadd.f32 0.0, %v363
      %v365 = vpop.f32.mrb[0].mxu0
      %v366 = vadd.f32 0.0, %v365
      %367 = vmatprep.mubr.f32.mxu0 0.0
      %368 = vmatmul.mubr.f32.gmra.mrb[0].mxu0 %v260
      %v369 = vpop.f32.mrb[0].mxu0
      %v370 = vadd.f32 0.0, %v369
      %v371 = vpop.f32.mrb[0].mxu0
      %v372 = vadd.f32 0.0, %v371
      %373 = vmatprep.mubr.f32.mxu0 0.0
      %374 = vmatmul.mubr.f32.gmra.mrb[0].mxu0 %v263
      %v375 = vpop.f32.mrb[0].mxu0
      %v376 = vadd.f32 0.0, %v375
      %v377 = vpop.f32.mrb[0].mxu0
      %v378 = vadd.f32 0.0, %v377
      %379 = vmatprep.mubr.f32.mxu0 0.0
      %380 = vmatmul.mubr.f32.gmra.mrb[0].mxu0 %v266
      %v381 = vpop.f32.mrb[0].mxu0
      %v382 = vadd.f32 0.0, %v381
      %v383 = vpop.f32.mrb[0].mxu0
      %v384 = vadd.f32 0.0, %v383
      %385 = vdwg.mxu0
      %v386 = vadd.f32 %v340, %v342
      %387 = vadd.xlane.f32.xlu0 %v386
      %v388 = vpop.xlane.xlu0 %387
      %v389 = vadd.f32 %v346, %v348
      %390 = vadd.xlane.f32.xlu0 %v389
      %v391 = vpop.xlane.xlu0 %390
      %v392 = vadd.f32 %v352, %v354
      %393 = vadd.xlane.f32.xlu0 %v392
      %v394 = vpop.xlane.xlu0 %393
      %v395 = vadd.f32 %v358, %v360
      %396 = vadd.xlane.f32.xlu0 %v395
      %v397 = vpop.xlane.xlu0 %396
      %v398 = vadd.f32 %v364, %v366
      %399 = vadd.xlane.f32.xlu0 %v398
      %v400 = vpop.xlane.xlu0 %399
      %v401 = vadd.f32 %v370, %v372
      %402 = vadd.xlane.f32.xlu0 %v401
      %v403 = vpop.xlane.xlu0 %402
      %v404 = vadd.f32 %v376, %v378
      %405 = vadd.xlane.f32.xlu0 %v404
      %v406 = vpop.xlane.xlu0 %405
      %v407 = vadd.f32 %v382, %v384
      %408 = vadd.xlane.f32.xlu0 %v407
      %v409 = vpop.xlane.xlu0 %408
      %vm410 = vcmask 7168
      %411 = vst.msk [vmem:[%s222] sm:$0xff] %vm410, %v388
      %412 = vst.msk [vmem:[%s222 + $0x8] sm:$0xff] %vm410, %v391
      %413 = vst.msk [vmem:[%s222 + $0x10] sm:$0xff] %vm410, %v394
      %414 = vst.msk [vmem:[%s222 + $0x18] sm:$0xff] %vm410, %v397
      %415 = vst.msk [vmem:[%s222 + $0x20] sm:$0xff] %vm410, %v400
      %416 = vst.msk [vmem:[%s222 + $0x28] sm:$0xff] %vm410, %v403
      %417 = vst.msk [vmem:[%s222 + $0x30] sm:$0xff] %vm410, %v406
      %418 = vst.msk [vmem:[%s222 + $0x38] sm:$0xff] %vm410, %v409
      %v419 = vmul.f32 %v340, %v340
      %v420 = vmul.f32 %v342, %v342
      %v421 = vmul.f32 %v346, %v346
      %v422 = vmul.f32 %v348, %v348
      %v423 = vmul.f32 %v352, %v352
      %v424 = vmul.f32 %v354, %v354
      %v425 = vmul.f32 %v358, %v358
      %v426 = vmul.f32 %v360, %v360
      %v427 = vmul.f32 %v364, %v364
      %v428 = vmul.f32 %v366, %v366
      %v429 = vmul.f32 %v370, %v370
      %v430 = vmul.f32 %v372, %v372
      %v431 = vmul.f32 %v376, %v376
      %v432 = vmul.f32 %v378, %v378
      %v433 = vmul.f32 %v382, %v382
      %v434 = vmul.f32 %v384, %v384
      %v435 = vadd.f32 %v419, %v420
      %436 = vadd.xlane.f32.xlu0 %v435
      %v437 = vpop.xlane.xlu0 %436
      %v438 = vadd.f32 %v421, %v422
      %439 = vadd.xlane.f32.xlu0 %v438
      %v440 = vpop.xlane.xlu0 %439
      %v441 = vadd.f32 %v423, %v424
      %442 = vadd.xlane.f32.xlu0 %v441
      %v443 = vpop.xlane.xlu0 %442
      %v444 = vadd.f32 %v425, %v426
      %445 = vadd.xlane.f32.xlu0 %v444
      %v446 = vpop.xlane.xlu0 %445
      %v447 = vadd.f32 %v427, %v428
      %448 = vadd.xlane.f32.xlu0 %v447
      %v449 = vpop.xlane.xlu0 %448
      %v450 = vadd.f32 %v429, %v430
      %451 = vadd.xlane.f32.xlu0 %v450
      %v452 = vpop.xlane.xlu0 %451
      %v453 = vadd.f32 %v431, %v432
      %454 = vadd.xlane.f32.xlu0 %v453
      %v455 = vpop.xlane.xlu0 %454
      %v456 = vadd.f32 %v433, %v434
      %457 = vadd.xlane.f32.xlu0 %v456
      %v458 = vpop.xlane.xlu0 %457
      %459 = vst.msk [vmem:[%s231] sm:$0xff] %vm410, %v437
      %460 = vst.msk [vmem:[%s231 + $0x8] sm:$0xff] %vm410, %v440
      %461 = vst.msk [vmem:[%s231 + $0x10] sm:$0xff] %vm410, %v443
      %462 = vst.msk [vmem:[%s231 + $0x18] sm:$0xff] %vm410, %v446
      %463 = vst.msk [vmem:[%s231 + $0x20] sm:$0xff] %vm410, %v449
      %464 = vst.msk [vmem:[%s231 + $0x28] sm:$0xff] %vm410, %v452
      %465 = vst.msk [vmem:[%s231 + $0x30] sm:$0xff] %vm410, %v455
      %466 = vst.msk [vmem:[%s231 + $0x38] sm:$0xff] %vm410, %v458
      %p467 = scmp.lt.s32.totalorder %s19, 1
      %s468 = scalar_select %p467, %s19, 1
      %p469 = scmp.lt.s32.totalorder %s20, 0
      %s470 = scalar_select %p469, %s20, 0
      %s471 = smul.addr %s470, 8
      %s472 = smul.addr %s468, 8
      %s473 = sadd.s32 %s471, %s472
      %s474 = smul.addr %s473, 8
      %s475 = scalar_lea.vmem %s2, %s474
      %p476 = scmp.lt.s32.totalorder %s19, 1
      %s477 = scalar_select %p476, %s19, 1
      %p478 = scmp.lt.s32.totalorder %s20, 0
      %s479 = scalar_select %p478, %s20, 0
      %s480 = smul.addr %s479, 8
      %s481 = smul.addr %s477, 8
      %s482 = sadd.s32 %s480, %s481
      %s483 = smul.addr %s482, 8
      %s484 = scalar_lea.vmem %s3, %s483
      // Predicated region
      $region29: #{conv_encoder_forward.3} parent=27 // pred_check
        %p485 = pneg %p96
      $region30: #{conv_encoder_forward.3} parent=27 // pred_check_branch
        %487 = sbr.rel (%p485) target = $region32
      $region31: #{conv_encoder_forward.3} parent=27 // pred_region
        _
      $region32: #{conv_encoder_forward.3} parent=27 // pred_fallthru
        _
      // Predicated region
      $region33: #{conv_encoder_forward.3} parent=27 // pred_check
        %p488 = pneg %p124
      $region34: #{conv_encoder_forward.3} parent=27 // pred_check_branch
        %490 = sbr.rel (%p488) target = $region36
      $region35: #{conv_encoder_forward.3} parent=27 // pred_region
        _
      $region36: #{conv_encoder_forward.3} parent=27 // pred_fallthru
        _
    $region28: #{conv_encoder_forward.3} parent=5 // pred_fallthru
      _
    %p491 = scmp.le.s32.totalorder 2, %s10
    // Predicated region
    $region37: #{conv_encoder_forward.3} parent=5 // pred_check
      %p492 = pneg %p491
    $region38: #{conv_encoder_forward.3} parent=5 // pred_check_branch
      %494 = sbr.rel (%p492) target = $region40
    $region39: #{conv_encoder_forward.3} parent=5 // pred_region
      %s495 = ssub.s32 %s10, 2
      // Predicated region
      $region41: #{conv_encoder_forward.3} parent=39 // pred_check
        %p496 = pneg %p102
      $region42: #{conv_encoder_forward.3} parent=39 // pred_check_branch
        %498 = sbr.rel (%p496) target = $region44
      $region43: #{conv_encoder_forward.3} parent=39 // pred_region
        %p499 = scmp.lt.s32.totalorder %s21, 1
        %s500 = scalar_select %p499, %s21, 1
        %p501 = scmp.lt.s32.totalorder %s22, 0
        %s502 = scalar_select %p501, %s22, 0
        %s503 = smul.addr %s502, 8
        %s504 = smul.addr %s500, 8
        %s505 = sadd.s32 %s503, %s504
        %s506 = smul.addr %s505, 8
        %s507 = scalar_lea.vmem %s2, %s506
      $region44: #{conv_encoder_forward.3} parent=39 // pred_fallthru
        _
      // Predicated region
      $region45: #{conv_encoder_forward.3} parent=39 // pred_check
        %p508 = pneg %p130
      $region46: #{conv_encoder_forward.3} parent=39 // pred_check_branch
        %510 = sbr.rel (%p508) target = $region48
      $region47: #{conv_encoder_forward.3} parent=39 // pred_region
        %p511 = scmp.lt.s32.totalorder %s21, 1
        %s512 = scalar_select %p511, %s21, 1
        %p513 = scmp.lt.s32.totalorder %s22, 0
        %s514 = scalar_select %p513, %s22, 0
        %s515 = smul.addr %s514, 8
        %s516 = smul.addr %s512, 8
        %s517 = sadd.s32 %s515, %s516
        %s518 = smul.addr %s517, 8
        %s519 = scalar_lea.vmem %s3, %s518
      $region48: #{conv_encoder_forward.3} parent=39 // pred_fallthru
        _
    $region40: #{conv_encoder_forward.3} parent=5 // pred_fallthru
      _
  $region6: #{conv_encoder_forward.3} parent=0 // loop_footer
    %s14 = sadd.s32 1, %s10
  $region7: #{conv_encoder_forward.3} parent=0 // loop_footer_branch
    %9 = sbr.rel target = $region3
  $region8: #{conv_encoder_forward.3} parent=0 // loop_exit
    _

// kernel: conv_encoder_forward.4
$region0: #{conv_encoder_forward.4}
  #allocation0 [shape = 'u32[]', space=smem, size = 0x4, offset = 0x4, fixed_abs, tag = 'smem constant byte address 0x4 - core index']
  #allocation1 [shape = 'u32[144,128]{1,0:T(1,128)}', space=vmem, size = 0x12000, scoped, tag = 'internal scratch']
  %s0 = inlined_call_operand.vmem [shape: f32[2,4,256], index: 0, kind: input, shape index: {}]
  %s1 = inlined_call_operand.vmem [shape: f32[64,4], index: 1, kind: input, shape index: {}]
  %s2 = inlined_call_operand.vmem [shape: f32[64,1], index: 2, kind: input, shape index: {}]
  %s3 = inlined_call_operand.vmem [shape: f32[3,64], index: 3, kind: input, shape index: {}]
  %s4 = inlined_call_operand.vmem [shape: f32[2,1,3,1], index: 4, kind: output, shape index: {0}]
  %s5 = inlined_call_operand.vmem [shape: f32[2,1,3,1], index: 5, kind: output, shape index: {1}]
  %6 = xla_tuple %s4, %s5
  %s7 = sld [smem:[#allocation0]]
  $region57: #{conv_encoder_forward.4} parent=0
    _
  %s9 = ssub.s32 1, %s7
  %s10 = scalar_select 0, %s9, %s7
  loop: start=0, step=1, limit=4
  $region2: #{conv_encoder_forward.4} parent=0 // loop_pre_header
    _
  $region3: #{conv_encoder_forward.4} parent=0 // loop_header
    %s12 = sphi 0, %s16
    %p13 = scmp.ge.s32.totalorder %s12, 4
    %s19 = sphi 0, %s31
    %s20 = sphi 0, %s27
    %s21 = sphi 0, %s19
    %s22 = sphi 0, %s20
    %s23 = sphi 0, %s21
    %s24 = sphi 0, %s22
    %s36 = sphi 0, %s38
    %s39 = sphi 0, %s36
    %s40 = sphi 0, %s39
    %s56 = sphi 0, %s40
    %s60 = sphi 0, %s60
    %s62 = sphi 0, %s60
    %s63 = sphi 0, %s62
    %s77 = sphi 0, %s63
    %s81 = sphi 0, %s81
    %s83 = sphi 0, %s81
    %s84 = sphi 0, %s83
    %s98 = sphi 0, %s84
    %s102 = sphi 0, %s102
    %s104 = sphi 0, %s102
    %s105 = sphi 0, %s104
    %s119 = sphi 0, %s105
    %s127 = sphi 0, %s129
    %s130 = sphi 0, %s127
    %s131 = sphi 0, %s130
    %s147 = sphi 0, %s131
    %s155 = sphi 0, %s157
    %s158 = sphi 0, %s155
    %s159 = sphi 0, %s158
    %s175 = sphi 0, %s159
  $region4: #{conv_encoder_forward.4} parent=0 // loop_header_branch
    %15 = sbr.rel (%p13) target = $region8
  $region5: #{conv_encoder_forward.4} parent=0 // loop_body
    %s17 = ssub.s32 %s12, 1
    %s18 = ssub.s32 %s12, 2
    %s25 = sadd.s32 1, %s20
    %p26 = scmp.ge.s32.totalorder %s25, 1
    %s27 = scalar_select %p26, 0, %s25
    %s28 = sadd.s32 1, %s19
    %s29 = scalar_select %p26, %s28, %s19
    %p30 = scmp.ge.s32.totalorder %s29, 2
    %s31 = scalar_select %p30, 0, %s29
    %s32 = ssub.s32 %s19, %s31
    %s33 = ssub.s32 %s20, %s27
    %s34 = sor.u32 %s32, %s33
    %p35 = scmp.eq.s32.totalorder %s34, 0
    %s37 = sadd.s32 %s36, 1
    %s38 = scalar_select %p35, %s36, %s37
    %p41 = pneg %p35
    %p42 = scmp.eq.s32.totalorder %s12, 1
    %p43 = por %p41, %p42
    %p44 = scmp.ne.s32.totalorder %s36, %s39
    %p45 = scmp.eq.s32.totalorder %s12, 0
    %p46 = por %p44, %p45
    %p47 = scmp.ne.s32.totalorder %s36, %s39
    %p48 = scmp.eq.s32.totalorder %s17, 1
    %p49 = por %p47, %p48
    %p50 = scmp.ne.s32.totalorder %s39, %s40
    %p51 = scmp.eq.s32.totalorder %s17, 0
    %p52 = por %p50, %p51
    %p53 = scmp.ne.s32.totalorder %s39, %s40
    %p54 = scmp.eq.s32.totalorder %s18, 1
    %p55 = por %p53, %p54
    %p57 = scmp.ne.s32.totalorder %s40, %s56
    %p58 = scmp.eq.s32.totalorder %s18, 0
    %p59 = por %p57, %p58
    %s61 = sadd.s32 %s60, 1
    %p64 = scmp.eq.s32.totalorder %s12, 1
    %p65 = scmp.ne.s32.totalorder %s60, %s62
    %p66 = scmp.eq.s32.totalorder %s12, 0
    %p67 = por %p65, %p66
    %p68 = scmp.ne.s32.totalorder %s60, %s62
    %p69 = scmp.eq.s32.totalorder %s17, 1
    %p70 = por %p68, %p69
    %p71 = scmp.ne.s32.totalorder %s62, %s63
    %p72 = scmp.eq.s32.totalorder %s17, 0
    %p73 = por %p71, %p72
    %p74 = scmp.ne.s32.totalorder %s62, %s63
    %p75 = scmp.eq.s32.totalorder %s18, 1
    %p76 = por %p74, %p75
    %p78 = scmp.ne.s32.totalorder %s63, %s77
    %p79 = scmp.eq.s32.totalorder %s18, 0
    %p80 = por %p78, %p79
    %s82 = sadd.s32 %s81, 1
    %p85 = scmp.eq.s32.totalorder %s12, 1
    %p86 = scmp.ne.s32.totalorder %s81, %s83
    %p87 = scmp.eq.s32.totalorder %s12, 0
    %p88 = por %p86, %p87
    %p89 = scmp.ne.s32.totalorder %s81, %s83
    %p90 = scmp.eq.s32.totalorder %s17, 1
    %p91 = por %p89, %p90
    %p92 = scmp.ne.s32.totalorder %s83, %s84
    %p93 = scmp.eq.s32.totalorder %s17, 0
    %p94 = por %p92, %p93
    %p95 = scmp.ne.s32.totalorder %s83, %s84
    %p96 = scmp.eq.s32.totalorder %s18, 1
    %p97 = por %p95, %p96
    %p99 = scmp.ne.s32.totalorder %s84, %s98
    %p100 = scmp.eq.s32.totalorder %s18, 0
    %p101 = por %p99, %p100
    %s103 = sadd.s32 %s102, 1
    %p106 = scmp.eq.s32.totalorder %s12, 1
    %p107 = scmp.ne.s32.totalorder %s102, %s104
    %p108 = scmp.eq.s32.totalorder %s12, 0
    %p109 = por %p107, %p108
    %p110 = scmp.ne.s32.totalorder %s102, %s104
    %p111 = scmp.eq.s32.totalorder %s17, 1
    %p112 = por %p110, %p111
    %p113 = scmp.ne.s32.totalorder %s104, %s105
    %p114 = scmp.eq.s32.totalorder %s17, 0
    %p115 = por %p113, %p114
    %p116 = scmp.ne.s32.totalorder %s104, %s105
    %p117 = scmp.eq.s32.totalorder %s18, 1
    %p118 = por %p116, %p117
    %p120 = scmp.ne.s32.totalorder %s105, %s119
    %p121 = scmp.eq.s32.totalorder %s18, 0
    %p122 = por %p120, %p121
    %s123 = ssub.s32 %s19, %s31
    %s124 = ssub.s32 %s20, %s27
    %s125 = sor.u32 %s123, %s124
    %p126 = scmp.eq.s32.totalorder %s125, 0
    %s128 = sadd.s32 %s127, 1
    %s129 = scalar_select %p126, %s127, %s128
    %p132 = pneg %p126
    %p133 = scmp.eq.s32.totalorder %s12, 1
    %p134 = por %p132, %p133
    %p135 = scmp.ne.s32.totalorder %s127, %s130
    %p136 = scmp.eq.s32.totalorder %s12, 0
    %p137 = por %p135, %p136
    %p138 = scmp.ne.s32.totalorder %s127, %s130
    %p139 = scmp.eq.s32.totalorder %s17, 1
    %p140 = por %p138, %p139
    %p141 = scmp.ne.s32.totalorder %s130, %s131
    %p142 = scmp.eq.s32.totalorder %s17, 0
    %p143 = por %p141, %p142
    %p144 = scmp.ne.s32.totalorder %s130, %s131
    %p145 = scmp.eq.s32.totalorder %s18, 1
    %p146 = por %p144, %p145
    %p148 = scmp.ne.s32.totalorder %s131, %s147
    %p149 = scmp.eq.s32.totalorder %s18, 0
    %p150 = por %p148, %p149
    %s151 = ssub.s32 %s19, %s31
    %s152 = ssub.s32 %s20, %s27
    %s153 = sor.u32 %s151, %s152
    %p154 = scmp.eq.s32.totalorder %s153, 0
    %s156 = sadd.s32 %s155, 1
    %s157 = scalar_select %p154, %s155, %s156
    %p160 = pneg %p154
    %p161 = scmp.eq.s32.totalorder %s12, 1
    %p162 = por %p160, %p161
    %p163 = scmp.ne.s32.totalorder %s155, %s158
    %p164 = scmp.eq.s32.totalorder %s12, 0
    %p165 = por %p163, %p164
    %p166 = scmp.ne.s32.totalorder %s155, %s158
    %p167 = scmp.eq.s32.totalorder %s17, 1
    %p168 = por %p166, %p167
    %p169 = scmp.ne.s32.totalorder %s158, %s159
    %p170 = scmp.eq.s32.totalorder %s17, 0
    %p171 = por %p169, %p170
    %p172 = scmp.ne.s32.totalorder %s158, %s159
    %p173 = scmp.eq.s32.totalorder %s18, 1
    %p174 = por %p172, %p173
    %p176 = scmp.ne.s32.totalorder %s159, %s175
    %p177 = scmp.eq.s32.totalorder %s18, 0
    %p178 = por %p176, %p177
    %p179 = scmp.le.s32.totalorder 1, %s12
    %p180 = scmp.lt.s32.totalorder %s12, 3
    %p181 = pnand %p179, %p180
    %p182 = pneg %p181
    // Predicated region
    $region9: #{conv_encoder_forward.4} parent=5 // pred_check
      _
    $region10: #{conv_encoder_forward.4} parent=5 // pred_check_branch
      %184 = sbr.rel (%p181) target = $region12
    $region11: #{conv_encoder_forward.4} parent=5 // pred_region
      %s185 = ssub.s32 %s12, 1
      // Predicated region
      $region13: #{conv_encoder_forward.4} parent=11 // pred_check
        %p186 = pneg %p73
      $region14: #{conv_encoder_forward.4} parent=11 // pred_check_branch
        %188 = sbr.rel (%p186) target = $region16
      $region15: #{conv_encoder_forward.4} parent=11 // pred_region
        _
      $region16: #{conv_encoder_forward.4} parent=11 // pred_fallthru
        _
      // Predicated region
      $region17: #{conv_encoder_forward.4} parent=11 // pred_check
        %p189 = pneg %p94
      $region18: #{conv_encoder_forward.4} parent=11 // pred_check_branch
        %191 = sbr.rel (%p189) target = $region20
      $region19: #{conv_encoder_forward.4} parent=11 // pred_region
        _
      $region20: #{conv_encoder_forward.4} parent=11 // pred_fallthru
        _
      // Predicated region
      $region21: #{conv_encoder_forward.4} parent=11 // pred_check
        %p192 = pneg %p115
      $region22: #{conv_encoder_forward.4} parent=11 // pred_check_branch
        %194 = sbr.rel (%p192) target = $region24
      $region23: #{conv_encoder_forward.4} parent=11 // pred_region
        _
      $region24: #{conv_encoder_forward.4} parent=11 // pred_fallthru
        _
    $region12: #{conv_encoder_forward.4} parent=5 // pred_fallthru
      _
    %p195 = scmp.lt.s32.totalorder %s12, 2
    // Predicated region
    $region25: #{conv_encoder_forward.4} parent=5 // pred_check
      %p196 = pneg %p195
    $region26: #{conv_encoder_forward.4} parent=5 // pred_check_branch
      %198 = sbr.rel (%p196) target = $region28
    $region27: #{conv_encoder_forward.4} parent=5 // pred_region
      // Predicated region
      $region29: #{conv_encoder_forward.4} parent=27 // pred_check
        %p199 = pneg %p46
      $region30: #{conv_encoder_forward.4} parent=27 // pred_check_branch
        %201 = sbr.rel (%p199) target = $region32
      $region31: #{conv_encoder_forward.4} parent=27 // pred_region
        %s202 = smul.u32 2, %s20
        %p203 = scmp.lt.s32.totalorder %s19, 1
        %s204 = scalar_select %p203, %s19, 1
        %p205 = scmp.lt.s32.totalorder %s202, 1
        %s206 = scalar_select %p205, %s202, 1
        %s207 = smul.addr %s204, 2
        %s208 = sadd.s32 %s206, %s207
        %s209 = smul.addr %s208, 4
        %s210 = scalar_lea.vmem %s0, %s209
        %s211 = smul.u32 2, %s20
      $region32: #{conv_encoder_forward.4} parent=27 // pred_fallthru
        _
    $region28: #{conv_encoder_forward.4} parent=5 // pred_fallthru
      _
    %p212 = scmp.le.s32.totalorder 1, %s12
    %p213 = scmp.lt.s32.totalorder %s12, 3
    %p214 = pnand %p212, %p213
    %p215 = pneg %p214
    // Predicated region
    $region33: #{conv_encoder_forward.4} parent=5 // pred_check
      _
    $region34: #{conv_encoder_forward.4} parent=5 // pred_check_branch
      %217 = sbr.rel (%p214) target = $region36
    $region35: #{conv_encoder_forward.4} parent=5 // pred_region
      %s218 = ssub.s32 %s12, 1
      %s219 = smul.u32 2, %s22
      %p220 = scmp.lt.s32.totalorder %s21, 1
      %s221 = scalar_select %p220, %s21, 1
      %p222 = scmp.lt.s32.totalorder %s219, 1
      %s223 = scalar_select %p222, %s219, 1
      %s224 = smul.addr %s221, 2
      %s225 = sadd.s32 %s223, %s224
      %s226 = smul.addr %s225, 4
      %s227 = scalar_lea.vmem %s0, %s226
      %p228 = pneg %p52
      %p229 = pneg %p49
      %p230 = pneg %p73
      %p231 = pneg %p70
      %p232 = pneg %p94
      %p233 = pneg %p91
      %p234 = pneg %p115
      %p235 = pneg %p112
      %p236 = pneg %p143
      %p237 = pneg %p140
      %p238 = scmp.lt.s32.totalorder %s21, 1
      %s239 = scalar_select %p238, %s21, 1
      %p240 = scmp.lt.s32.totalorder %s22, 0
      %s241 = scalar_select %p240, %s22, 0
      %s242 = sadd.s32 %s241, %s239
      %s243 = smul.addr %s242, 4
      %s244 = scalar_lea.vmem %s4, %s243
      %p245 = pneg %p171
      %p246 = pneg %p168
      %p247 = scmp.lt.s32.totalorder %s21, 1
      %s248 = scalar_select %p247, %s21, 1
      %p249 = scmp.lt.s32.totalorder %s22, 0
      %s250 = scalar_select %p249, %s22, 0
      %s251 = sadd.s32 %s250, %s248
      %s252 = smul.addr %s251, 4
      %s253 = scalar_lea.vmem %s5, %s252
      %s254 = smul.u32 2, %s22
      %p255 = scmp.lt.s32.totalorder %s21, 1
      %s256 = scalar_select %p255, %s21, 1
      %p257 = scmp.lt.s32.totalorder %s254, 1
      %s258 = scalar_select %p257, %s254, 1
      %s259 = smul.addr %s256, 2
      %s260 = sadd.s32 %s258, %s259
      %s261 = smul.addr %s260, 4
      %s262 = scalar_lea.vmem %s0, %s261
      %s263 = smul.u32 2, %s22
      %p264 = scmp.lt.s32.totalorder %s21, 1
      %s265 = scalar_select %p264, %s21, 1
      %p266 = scmp.lt.s32.totalorder %s22, 0
      %s267 = scalar_select %p266, %s22, 0
      %s268 = sadd.s32 %s267, %s265
      %s269 = smul.addr %s268, 4
      %s270 = scalar_lea.vmem %s4, %s269
      %p271 = scmp.lt.s32.totalorder %s21, 1
      %s272 = scalar_select %p271, %s21, 1
      %p273 = scmp.lt.s32.totalorder %s22, 0
      %s274 = scalar_select %p273, %s22, 0
      %s275 = sadd.s32 %s274, %s272
      %s276 = smul.addr %s275, 4
      %s277 = scalar_lea.vmem %s5, %s276
      %v278 = vld [vmem:[%s262] sm:$0xff]
      %v279 = vld [vmem:[%s1] sm:$0xff]
      %v280 = vld [vmem:[%s1 + $0x8] sm:$0xff]
      %v281 = vld [vmem:[%s1 + $0x10] sm:$0xff]
      %v282 = vld [vmem:[%s1 + $0x18] sm:$0xff]
      %v283 = vld [vmem:[%s1 + $0x20] sm:$0xff]
      %v284 = vld [vmem:[%s1 + $0x28] sm:$0xff]
      %v285 = vld [vmem:[%s1 + $0x30] sm:$0xff]
      %v286 = vld [vmem:[%s1 + $0x38] sm:$0xff]
      %v287 = vld [vmem:[%s2] sm:$0xff]
      %v288 = vld [vmem:[%s2 + $0x8] sm:$0xff]
      %v289 = vld [vmem:[%s2 + $0x10] sm:$0xff]
      %v290 = vld [vmem:[%s2 + $0x18] sm:$0xff]
      %v291 = vld [vmem:[%s2 + $0x20] sm:$0xff]
      %v292 = vld [vmem:[%s2 + $0x28] sm:$0xff]
      %v293 = vld [vmem:[%s2 + $0x30] sm:$0xff]
      %v294 = vld [vmem:[%s2 + $0x38] sm:$0xff]
      %296 = vset.pattern.permute.xlu0 0
      %297 = vperm.xlu0 %296, %v287
      %v298 = vpop.permute.xlu0 %297
      %301 = vset.pattern.permute.xlu0 0
      %302 = vperm.xlu0 %301, %v288
      %v303 = vpop.permute.xlu0 %302
      %306 = vset.pattern.permute.xlu0 0
      %307 = vperm.xlu0 %306, %v289
      %v308 = vpop.permute.xlu0 %307
      %311 = vset.pattern.permute.xlu0 0
      %312 = vperm.xlu0 %311, %v290
      %v313 = vpop.permute.xlu0 %312
      %316 = vset.pattern.permute.xlu0 0
      %317 = vperm.xlu0 %316, %v291
      %v318 = vpop.permute.xlu0 %317
      %321 = vset.pattern.permute.xlu0 0
      %322 = vperm.xlu0 %321, %v292
      %v323 = vpop.permute.xlu0 %322
      %326 = vset.pattern.permute.xlu0 0
      %327 = vperm.xlu0 %326, %v293
      %v328 = vpop.permute.xlu0 %327
      %331 = vset.pattern.permute.xlu0 0
      %332 = vperm.xlu0 %331, %v294
      %v333 = vpop.permute.xlu0 %332
      %v336 = vcombine.high %v278, %v278
      %vm337 = vcmask 31744
      %v339 = vsel %vm337, %v279, 0
      %v342 = vsel %vm337, %v280, 0
      %v345 = vsel %vm337, %v281, 0
      %v348 = vsel %vm337, %v282, 0
      %v351 = vsel %vm337, %v283, 0
      %v354 = vsel %vm337, %v284, 0
      %v357 = vsel %vm337, %v285, 0
      %v360 = vsel %vm337, %v286, 0
      %vm362 = vcmask 1043456
      %v363 = vsel %vm362, %v278, 0
      %v365 = vsel %vm362, %v336, 0
      %367 = vmatprep.subr.mxu0 %v365
      %368 = vmatpush1.msra.mxu0 %v363
      %369 = vmatprep.subr.mxu0 0.0
      %370 = vmatpush1.msra.mxu0 0.0
      %371 = vmatprep.subr.mxu0 0.0
      %372 = vmatpush1.msra.mxu0 0.0
      %373 = vmatprep.subr.mxu0 0.0
      %374 = vmatpush1.msra.mxu0 0.0
      %375 = vmatprep.subr.mxu0 0.0
      %376 = vmatpush1.msra.mxu0 0.0
      %377 = vmatprep.subr.mxu0 0.0
      %378 = vmatpush1.msra.mxu0 0.0
      %379 = vmatprep.subr.mxu0 0.0
      %380 = vmatpush1.msra.mxu0 0.0
      %381 = vmatprep.subr.mxu0 0.0
      %382 = vmatpush1.msra.mxu0 0.0
      %383 = vmatprep.subr.mxu0 0.0
      %384 = vmatpush1.msra.mxu0 0.0
      %385 = vmatprep.subr.mxu0 0.0
      %386 = vmatpush1.msra.mxu0 0.0
      %387 = vmatprep.subr.mxu0 0.0
      %388 = vmatpush1.msra.mxu0 0.0
      %389 = vmatprep.subr.mxu0 0.0
      %390 = vmatpush1.msra.mxu0 0.0
      %391 = vmatprep.subr.mxu0 0.0
      %392 = vmatpush1.msra.mxu0 0.0
      %393 = vmatprep.subr.mxu0 0.0
      %394 = vmatpush1.msra.mxu0 0.0
      %395 = vmatprep.subr.mxu0 0.0
      %396 = vmatpush1.msra.mxu0 0.0
      %397 = vmatprep.subr.mxu0 0.0
      %398 = vmatpush1.msra.mxu0 0.0
      %399 = vmatprep.subr.mxu0 0.0
      %400 = vmatpush1.msra.mxu0 0.0
      %401 = vmatprep.subr.mxu0 0.0
      %402 = vmatpush1.msra.mxu0 0.0
      %403 = vmatprep.subr.mxu0 0.0
      %404 = vmatpush1.msra.mxu0 0.0
      %405 = vmatprep.subr.mxu0 0.0
      %406 = vmatpush1.msra.mxu0 0.0
      %407 = vmatprep.subr.mxu0 0.0
      %408 = vmatpush1.msra.mxu0 0.0
      %409 = vmatprep.subr.mxu0 0.0
      %410 = vmatpush1.msra.mxu0 0.0
      %411 = vmatprep.subr.mxu0 0.0
      %412 = vmatpush1.msra.mxu0 0.0
      %413 = vmatprep.subr.mxu0 0.0
      %414 = vmatpush1.msra.mxu0 0.0
      %415 = vmatprep.subr.mxu0 0.0
      %416 = vmatpush1.msra.mxu0 0.0
      %417 = vmatprep.subr.mxu0 0.0
      %418 = vmatpush1.msra.mxu0 0.0
      %419 = vmatprep.subr.mxu0 0.0
      %420 = vmatpush1.msra.mxu0 0.0
      %421 = vmatprep.subr.mxu0 0.0
      %422 = vmatpush1.msra.mxu0 0.0
      %423 = vmatprep.subr.mxu0 0.0
      %424 = vmatpush1.msra.mxu0 0.0
      %425 = vmatprep.subr.mxu0 0.0
      %426 = vmatpush1.msra.mxu0 0.0
      %427 = vmatprep.subr.mxu0 0.0
      %428 = vmatpush1.msra.mxu0 0.0
      %429 = vmatprep.subr.mxu0 0.0
      %430 = vmatpush1.msra.mxu0 0.0
      %431 = vmatprep.mubr.f32.mxu0 0.0
      %432 = vmatmul.mubr.f32.gmra.mrb[0].mxu0 %v339
      %v433 = vpop.f32.mrb[0].mxu0
      %v434 = vadd.f32 %v298, %v433
      %v435 = vpop.f32.mrb[0].mxu0
      %v436 = vadd.f32 %v298, %v435
      %437 = vmatprep.mubr.f32.mxu0 0.0
      %438 = vmatmul.mubr.f32.gmra.mrb[0].mxu0 %v342
      %v439 = vpop.f32.mrb[0].mxu0
      %v440 = vadd.f32 %v303, %v439
      %v441 = vpop.f32.mrb[0].mxu0
      %v442 = vadd.f32 %v303, %v441
      %443 = vmatprep.mubr.f32.mxu0 0.0
      %444 = vmatmul.mubr.f32.gmra.mrb[0].mxu0 %v345
      %v445 = vpop.f32.mrb[0].mxu0
      %v446 = vadd.f32 %v308, %v445
      %v447 = vpop.f32.mrb[0].mxu0
      %v448 = vadd.f32 %v308, %v447
      %449 = vmatprep.mubr.f32.mxu0 0.0
      %450 = vmatmul.mubr.f32.gmra.mrb[0].mxu0 %v348
      %v451 = vpop.f32.mrb[0].mxu0
      %v452 = vadd.f32 %v313, %v451
      %v453 = vpop.f32.mrb[0].mxu0
      %v454 = vadd.f32 %v313, %v453
      %455 = vmatprep.mubr.f32.mxu0 0.0
      %456 = vmatmul.mubr.f32.gmra.mrb[0].mxu0 %v351
      %v457 = vpop.f32.mrb[0].mxu0
      %v458 = vadd.f32 %v318, %v457
      %v459 = vpop.f32.mrb[0].mxu0
      %v460 = vadd.f32 %v318, %v459
      %461 = vmatprep.mubr.f32.mxu0 0.0
      %462 = vmatmul.mubr.f32.gmra.mrb[0].mxu0 %v354
      %v463 = vpop.f32.mrb[0].mxu0
      %v464 = vadd.f32 %v323, %v463
      %v465 = vpop.f32.mrb[0].mxu0
      %v466 = vadd.f32 %v323, %v465
      %467 = vmatprep.mubr.f32.mxu0 0.0
      %468 = vmatmul.mubr.f32.gmra.mrb[0].mxu0 %v357
      %v469 = vpop.f32.mrb[0].mxu0
      %v470 = vadd.f32 %v328, %v469
      %v471 = vpop.f32.mrb[0].mxu0
      %v472 = vadd.f32 %v328, %v471
      %473 = vmatprep.mubr.f32.mxu0 0.0
      %474 = vmatmul.mubr.f32.gmra.mrb[0].mxu0 %v360
      %v475 = vpop.f32.mrb[0].mxu0
      %v476 = vadd.f32 %v333, %v475
      %v477 = vpop.f32.mrb[0].mxu0
      %v478 = vadd.f32 %v333, %v477
      %479 = vdwg.mxu0
      %v480 = vsub.f32 0.0, %v434
      %v481 = vsub.f32 0.0, %v436
      %v482 = vsub.f32 0.0, %v440
      %v483 = vsub.f32 0.0, %v442
      %v484 = vsub.f32 0.0, %v446
      %v485 = vsub.f32 0.0, %v448
      %v486 = vsub.f32 0.0, %v452
      %v487 = vsub.f32 0.0, %v454
      %v488 = vsub.f32 0.0, %v458
      %v489 = vsub.f32 0.0, %v460
      %v490 = vsub.f32 0.0, %v464
      %v491 = vsub.f32 0.0, %v466
      %v492 = vsub.f32 0.0, %v470
      %v493 = vsub.f32 0.0, %v472
      %v494 = vsub.f32 0.0, %v476
      %v495 = vsub.f32 0.0, %v478
      %v496 = vmul.f32 %v480, 1.442695
      %v497 = vpow.pop %v496
      %v498 = vmul.f32 %v481, 1.442695
      %v499 = vpow.pop %v498
      %v500 = vmul.f32 %v482, 1.442695
      %v501 = vpow.pop %v500
      %v502 = vmul.f32 %v483, 1.442695
      %v503 = vpow.pop %v502
      %v504 = vmul.f32 %v484, 1.442695
      %v505 = vpow.pop %v504
      %v506 = vmul.f32 %v485, 1.442695
      %v507 = vpow.pop %v506
      %v508 = vmul.f32 %v486, 1.442695
      %v509 = vpow.pop %v508
      %v510 = vmul.f32 %v487, 1.442695
      %v511 = vpow.pop %v510
      %v512 = vmul.f32 %v488, 1.442695
      %v513 = vpow.pop %v512
      %v514 = vmul.f32 %v489, 1.442695
      %v515 = vpow.pop %v514
      %v516 = vmul.f32 %v490, 1.442695
      %v517 = vpow.pop %v516
      %v518 = vmul.f32 %v491, 1.442695
      %v519 = vpow.pop %v518
      %v520 = vmul.f32 %v492, 1.442695
      %v521 = vpow.pop %v520
      %v522 = vmul.f32 %v493, 1.442695
      %v523 = vpow.pop %v522
      %v524 = vmul.f32 %v494, 1.442695
      %v525 = vpow.pop %v524
      %v526 = vmul.f32 %v495, 1.442695
      %v527 = vpow.pop %v526
      %v528 = vadd.f32 %v497, 1.0
      %v529 = vadd.f32 %v499, 1.0
      %v530 = vadd.f32 %v501, 1.0
      %v531 = vadd.f32 %v503, 1.0
      %v532 = vadd.f32 %v505, 1.0
      %v533 = vadd.f32 %v507, 1.0
      %v534 = vadd.f32 %v509, 1.0
      %v535 = vadd.f32 %v511, 1.0
      %v536 = vadd.f32 %v513, 1.0
      %v537 = vadd.f32 %v515, 1.0
      %v538 = vadd.f32 %v517, 1.0
      %v539 = vadd.f32 %v519, 1.0
      %v540 = vadd.f32 %v521, 1.0
      %v541 = vadd.f32 %v523, 1.0
      %v542 = vadd.f32 %v525, 1.0
      %v543 = vadd.f32 %v527, 1.0
      %v544 = vrcp.pop %v528
      %v545 = vmul.f32 1.0, %v544
      %v546 = vrcp.pop %v529
      %v547 = vmul.f32 1.0, %v546
      %v548 = vrcp.pop %v530
      %v549 = vmul.f32 1.0, %v548
      %v550 = vrcp.pop %v531
      %v551 = vmul.f32 1.0, %v550
      %v552 = vrcp.pop %v532
      %v553 = vmul.f32 1.0, %v552
      %v554 = vrcp.pop %v533
      %v555 = vmul.f32 1.0, %v554
      %v556 = vrcp.pop %v534
      %v557 = vmul.f32 1.0, %v556
      %v558 = vrcp.pop %v535
      %v559 = vmul.f32 1.0, %v558
      %v560 = vrcp.pop %v536
      %v561 = vmul.f32 1.0, %v560
      %v562 = vrcp.pop %v537
      %v563 = vmul.f32 1.0, %v562
      %v564 = vrcp.pop %v538
      %v565 = vmul.f32 1.0, %v564
      %v566 = vrcp.pop %v539
      %v567 = vmul.f32 1.0, %v566
      %v568 = vrcp.pop %v540
      %v569 = vmul.f32 1.0, %v568
      %v570 = vrcp.pop %v541
      %v571 = vmul.f32 1.0, %v570
      %v572 = vrcp.pop %v542
      %v573 = vmul.f32 1.0, %v572
      %v574 = vrcp.pop %v543
      %v575 = vmul.f32 1.0, %v574
      %v576 = vmul.f32 %v434, %v545
      %v577 = vmul.f32 %v436, %v547
      %v578 = vmul.f32 %v440, %v549
      %v579 = vmul.f32 %v442, %v551
      %v580 = vmul.f32 %v446, %v553
      %v581 = vmul.f32 %v448, %v555
      %v582 = vmul.f32 %v452, %v557
      %v583 = vmul.f32 %v454, %v559
      %v584 = vmul.f32 %v458, %v561
      %v585 = vmul.f32 %v460, %v563
      %v586 = vmul.f32 %v464, %v565
      %v587 = vmul.f32 %v466, %v567
      %v588 = vmul.f32 %v470, %v569
      %v589 = vmul.f32 %v472, %v571
      %v590 = vmul.f32 %v476, %v573
      %v591 = vmul.f32 %v478, %v575
      %v592 = vld [vmem:[%s3] sm:$0x7]
      %vm593 = vcmask 523264
      %v595 = vsel %vm593, %v592, 0
      %597 = vmatprep.subr.mxu0 %v577
      %598 = vmatpush1.msra.mxu0 %v576
      %599 = vmatprep.subr.mxu0 %v579
      %600 = vmatpush1.msra.mxu0 %v578
      %601 = vmatprep.subr.mxu0 %v581
      %602 = vmatpush1.msra.mxu0 %v580
      %603 = vmatprep.subr.mxu0 %v583
      %604 = vmatpush1.msra.mxu0 %v582
      %605 = vmatprep.subr.mxu0 %v585
      %606 = vmatpush1.msra.mxu0 %v584
      %607 = vmatprep.subr.mxu0 %v587
      %608 = vmatpush1.msra.mxu0 %v586
      %609 = vmatprep.subr.mxu0 %v589
      %610 = vmatpush1.msra.mxu0 %v588
      %611 = vmatprep.subr.mxu0 %v591
      %612 = vmatpush1.msra.mxu0 %v590
      %613 = vmatprep.subr.mxu0 0.0
      %614 = vmatpush1.msra.mxu0 0.0
      %615 = vmatprep.subr.mxu0 0.0
      %616 = vmatpush1.msra.mxu0 0.0
      %617 = vmatprep.subr.mxu0 0.0
      %618 = vmatpush1.msra.mxu0 0.0
      %619 = vmatprep.subr.mxu0 0.0
      %620 = vmatpush1.msra.mxu0 0.0
      %621 = vmatprep.subr.mxu0 0.0
      %622 = vmatpush1.msra.mxu0 0.0
      %623 = vmatprep.subr.mxu0 0.0
      %624 = vmatpush1.msra.mxu0 0.0
      %625 = vmatprep.subr.mxu0 0.0
      %626 = vmatpush1.msra.mxu0 0.0
      %627 = vmatprep.subr.mxu0 0.0
      %628 = vmatpush1.msra.mxu0 0.0
      %629 = vmatprep.subr.mxu0 0.0
      %630 = vmatpush1.msra.mxu0 0.0
      %631 = vmatprep.subr.mxu0 0.0
      %632 = vmatpush1.msra.mxu0 0.0
      %633 = vmatprep.subr.mxu0 0.0
      %634 = vmatpush1.msra.mxu0 0.0
      %635 = vmatprep.subr.mxu0 0.0
      %636 = vmatpush1.msra.mxu0 0.0
      %637 = vmatprep.subr.mxu0 0.0
      %638 = vmatpush1.msra.mxu0 0.0
      %639 = vmatprep.subr.mxu0 0.0
      %640 = vmatpush1.msra.mxu0 0.0
      %641 = vmatprep.subr.mxu0 0.0
      %642 = vmatpush1.msra.mxu0 0.0
      %643 = vmatprep.subr.mxu0 0.0
      %644 = vmatpush1.msra.mxu0 0.0
      %645 = vmatprep.subr.mxu0 0.0
      %646 = vmatpush1.msra.mxu0 0.0
      %647 = vmatprep.subr.mxu0 0.0
      %648 = vmatpush1.msra.mxu0 0.0
      %649 = vmatprep.subr.mxu0 0.0
      %650 = vmatpush1.msra.mxu0 0.0
      %651 = vmatprep.subr.mxu0 0.0
      %652 = vmatpush1.msra.mxu0 0.0
      %653 = vmatprep.subr.mxu0 0.0
      %654 = vmatpush1.msra.mxu0 0.0
      %655 = vmatprep.subr.mxu0 0.0
      %656 = vmatpush1.msra.mxu0 0.0
      %657 = vmatprep.subr.mxu0 0.0
      %658 = vmatpush1.msra.mxu0 0.0
      %659 = vmatprep.subr.mxu0 0.0
      %660 = vmatpush1.msra.mxu0 0.0
      %661 = vmatprep.mubr.f32.mxu0 0.0
      %662 = vmatmul.mubr.f32.gmra.mrb[0].mxu0 %v595
      %v663 = vpop.f32.mrb[0].mxu0
      %v664 = vadd.f32 0.0, %v663
      %v665 = vpop.f32.mrb[0].mxu0
      %v666 = vadd.f32 0.0, %v665
      %667 = vdwg.mxu0
      %vm668 = vcmask 1042432
      %v669 = vsel %vm668, %v664, 0.0
      %v670 = vsel %vm668, %v666, 0.0
      %v671 = vadd.f32 %v669, %v670
      %672 = vadd.xlane.f32.xlu0 %v671
      %v673 = vpop.xlane.xlu0 %672
      %vm674 = vcmask 2048
      %675 = vst.msk [vmem:[%s270] sm:$0x7] %vm674, %v673
      %v676 = vmul.f32 %v664, %v664
      %v677 = vmul.f32 %v666, %v666
      %v678 = vsel %vm668, %v676, 0.0
      %v679 = vsel %vm668, %v677, 0.0
      %v680 = vadd.f32 %v678, %v679
      %681 = vadd.xlane.f32.xlu0 %v680
      %v682 = vpop.xlane.xlu0 %681
      %683 = vst.msk [vmem:[%s277] sm:$0x7] %vm674, %v682
      %p684 = scmp.lt.s32.totalorder %s21, 1
      %s685 = scalar_select %p684, %s21, 1
      %p686 = scmp.lt.s32.totalorder %s22, 0
      %s687 = scalar_select %p686, %s22, 0
      %s688 = sadd.s32 %s687, %s685
      %s689 = smul.addr %s688, 4
      %s690 = scalar_lea.vmem %s4, %s689
      %p691 = scmp.lt.s32.totalorder %s21, 1
      %s692 = scalar_select %p691, %s21, 1
      %p693 = scmp.lt.s32.totalorder %s22, 0
      %s694 = scalar_select %p693, %s22, 0
      %s695 = sadd.s32 %s694, %s692
      %s696 = smul.addr %s695, 4
      %s697 = scalar_lea.vmem %s5, %s696
      // Predicated region
      $region37: #{conv_encoder_forward.4} parent=35 // pred_check
        %p698 = pneg %p140
      $region38: #{conv_encoder_forward.4} parent=35 // pred_check_branch
        %700 = sbr.rel (%p698) target = $region40
      $region39: #{conv_encoder_forward.4} parent=35 // pred_region
        _
      $region40: #{conv_encoder_forward.4} parent=35 // pred_fallthru
        _
      // Predicated region
      $region41: #{conv_encoder_forward.4} parent=35 // pred_check
        %p701 = pneg %p168
      $region42: #{conv_encoder_forward.4} parent=35 // pred_check_branch
        %703 = sbr.rel (%p701) target = $region44
      $region43: #{conv_encoder_forward.4} parent=35 // pred_region
        _
      $region44: #{conv_encoder_forward.4} parent=35 // pred_fallthru
        _
    $region36: #{conv_encoder_forward.4} parent=5 // pred_fallthru
      _
    %p704 = scmp.le.s32.totalorder 2, %s12
    // Predicated region
    $region45: #{conv_encoder_forward.4} parent=5 // pred_check
      %p705 = pneg %p704
    $region46: #{conv_encoder_forward.4} parent=5 // pred_check_branch
      %707 = sbr.rel (%p705) target = $region48
    $region47: #{conv_encoder_forward.4} parent=5 // pred_region
      %s708 = ssub.s32 %s12, 2
      // Predicated region
      $region49: #{conv_encoder_forward.4} parent=47 // pred_check
        %p709 = pneg %p146
      $region50: #{conv_encoder_forward.4} parent=47 // pred_check_branch
        %711 = sbr.rel (%p709) target = $region52
      $region51: #{conv_encoder_forward.4} parent=47 // pred_region
        %p712 = scmp.lt.s32.totalorder %s23, 1
        %s713 = scalar_select %p712, %s23, 1
        %p714 = scmp.lt.s32.totalorder %s24, 0
        %s715 = scalar_select %p714, %s24, 0
        %s716 = sadd.s32 %s715, %s713
        %s717 = smul.addr %s716, 4
        %s718 = scalar_lea.vmem %s4, %s717
      $region52: #{conv_encoder_forward.4} parent=47 // pred_fallthru
        _
      // Predicated region
      $region53: #{conv_encoder_forward.4} parent=47 // pred_check
        %p719 = pneg %p174
      $region54: #{conv_encoder_forward.4} parent=47 // pred_check_branch
        %721 = sbr.rel (%p719) target = $region56
      $region55: #{conv_encoder_forward.4} parent=47 // pred_region
        %p722 = scmp.lt.s32.totalorder %s23, 1
        %s723 = scalar_select %p722, %s23, 1
        %p724 = scmp.lt.s32.totalorder %s24, 0
        %s725 = scalar_select %p724, %s24, 0
        %s726 = sadd.s32 %s725, %s723
        %s727 = smul.addr %s726, 4
        %s728 = scalar_lea.vmem %s5, %s727
      $region56: #{conv_encoder_forward.4} parent=47 // pred_fallthru
        _
    $region48: #{conv_encoder_forward.4} parent=5 // pred_fallthru
      _
  $region6: #{conv_encoder_forward.4} parent=0 // loop_footer
    %s16 = sadd.s32 1, %s12
  $region7: #{conv_encoder_forward.4} parent=0 // loop_footer_branch
    %11 = sbr.rel target = $region3
  $region8: #{conv_encoder_forward.4} parent=0 // loop_exit
    _

// kernel: conv_encoder_forward.5
$region0: #{conv_encoder_forward.5}
  #allocation0 [shape = 'u32[]', space=smem, size = 0x4, offset = 0x4, fixed_abs, tag = 'smem constant byte address 0x4 - core index']
  #allocation1 [shape = 'u32[144,128]{1,0:T(1,128)}', space=vmem, size = 0x12000, scoped, tag = 'internal scratch']
  %s0 = inlined_call_operand.vmem [shape: f32[2,4,256], index: 0, kind: input, shape index: {}]
  %s1 = inlined_call_operand.vmem [shape: f32[64,4], index: 1, kind: input, shape index: {}]
  %s2 = inlined_call_operand.vmem [shape: f32[64,1], index: 2, kind: input, shape index: {}]
  %s3 = inlined_call_operand.vmem [shape: f32[3,64], index: 3, kind: input, shape index: {}]
  %s4 = inlined_call_operand.vmem [shape: f32[3,1], index: 4, kind: input, shape index: {}]
  %s5 = inlined_call_operand.vmem [shape: f32[2,3,256], index: 5, kind: output, shape index: {}]
  %s6 = sld [smem:[#allocation0]]
  $region53: #{conv_encoder_forward.5} parent=0
    _
  %s8 = ssub.s32 1, %s6
  %s9 = scalar_select 0, %s8, %s6
  loop: start=0, step=1, limit=4
  $region2: #{conv_encoder_forward.5} parent=0 // loop_pre_header
    _
  $region3: #{conv_encoder_forward.5} parent=0 // loop_header
    %s11 = sphi 0, %s15
    %p12 = scmp.ge.s32.totalorder %s11, 4
    %s18 = sphi 0, %s30
    %s19 = sphi 0, %s26
    %s20 = sphi 0, %s18
    %s21 = sphi 0, %s19
    %s22 = sphi 0, %s20
    %s23 = sphi 0, %s21
    %s35 = sphi 0, %s37
    %s38 = sphi 0, %s35
    %s39 = sphi 0, %s38
    %s55 = sphi 0, %s39
    %s59 = sphi 0, %s59
    %s61 = sphi 0, %s59
    %s62 = sphi 0, %s61
    %s76 = sphi 0, %s62
    %s80 = sphi 0, %s80
    %s82 = sphi 0, %s80
    %s83 = sphi 0, %s82
    %s97 = sphi 0, %s83
    %s101 = sphi 0, %s101
    %s103 = sphi 0, %s101
    %s104 = sphi 0, %s103
    %s118 = sphi 0, %s104
    %s122 = sphi 0, %s122
    %s124 = sphi 0, %s122
    %s125 = sphi 0, %s124
    %s139 = sphi 0, %s125
    %s147 = sphi 0, %s149
    %s150 = sphi 0, %s147
    %s151 = sphi 0, %s150
    %s167 = sphi 0, %s151
  $region4: #{conv_encoder_forward.5} parent=0 // loop_header_branch
    %14 = sbr.rel (%p12) target = $region8
  $region5: #{conv_encoder_forward.5} parent=0 // loop_body
    %s16 = ssub.s32 %s11, 1
    %s17 = ssub.s32 %s11, 2
    %s24 = sadd.s32 1, %s19
    %p25 = scmp.ge.s32.totalorder %s24, 1
    %s26 = scalar_select %p25, 0, %s24
    %s27 = sadd.s32 1, %s18
    %s28 = scalar_select %p25, %s27, %s18
    %p29 = scmp.ge.s32.totalorder %s28, 2
    %s30 = scalar_select %p29, 0, %s28
    %s31 = ssub.s32 %s18, %s30
    %s32 = ssub.s32 %s19, %s26
    %s33 = sor.u32 %s31, %s32
    %p34 = scmp.eq.s32.totalorder %s33, 0
    %s36 = sadd.s32 %s35, 1
    %s37 = scalar_select %p34, %s35, %s36
    %p40 = pneg %p34
    %p41 = scmp.eq.s32.totalorder %s11, 1
    %p42 = por %p40, %p41
    %p43 = scmp.ne.s32.totalorder %s35, %s38
    %p44 = scmp.eq.s32.totalorder %s11, 0
    %p45 = por %p43, %p44
    %p46 = scmp.ne.s32.totalorder %s35, %s38
    %p47 = scmp.eq.s32.totalorder %s16, 1
    %p48 = por %p46, %p47
    %p49 = scmp.ne.s32.totalorder %s38, %s39
    %p50 = scmp.eq.s32.totalorder %s16, 0
    %p51 = por %p49, %p50
    %p52 = scmp.ne.s32.totalorder %s38, %s39
    %p53 = scmp.eq.s32.totalorder %s17, 1
    %p54 = por %p52, %p53
    %p56 = scmp.ne.s32.totalorder %s39, %s55
    %p57 = scmp.eq.s32.totalorder %s17, 0
    %p58 = por %p56, %p57
    %s60 = sadd.s32 %s59, 1
    %p63 = scmp.eq.s32.totalorder %s11, 1
    %p64 = scmp.ne.s32.totalorder %s59, %s61
    %p65 = scmp.eq.s32.totalorder %s11, 0
    %p66 = por %p64, %p65
    %p67 = scmp.ne.s32.totalorder %s59, %s61
    %p68 = scmp.eq.s32.totalorder %s16, 1
    %p69 = por %p67, %p68
    %p70 = scmp.ne.s32.totalorder %s61, %s62
    %p71 = scmp.eq.s32.totalorder %s16, 0
    %p72 = por %p70, %p71
    %p73 = scmp.ne.s32.totalorder %s61, %s62
    %p74 = scmp.eq.s32.totalorder %s17, 1
    %p75 = por %p73, %p74
    %p77 = scmp.ne.s32.totalorder %s62, %s76
    %p78 = scmp.eq.s32.totalorder %s17, 0
    %p79 = por %p77, %p78
    %s81 = sadd.s32 %s80, 1
    %p84 = scmp.eq.s32.totalorder %s11, 1
    %p85 = scmp.ne.s32.totalorder %s80, %s82
    %p86 = scmp.eq.s32.totalorder %s11, 0
    %p87 = por %p85, %p86
    %p88 = scmp.ne.s32.totalorder %s80, %s82
    %p89 = scmp.eq.s32.totalorder %s16, 1
    %p90 = por %p88, %p89
    %p91 = scmp.ne.s32.totalorder %s82, %s83
    %p92 = scmp.eq.s32.totalorder %s16, 0
    %p93 = por %p91, %p92
    %p94 = scmp.ne.s32.totalorder %s82, %s83
    %p95 = scmp.eq.s32.totalorder %s17, 1
    %p96 = por %p94, %p95
    %p98 = scmp.ne.s32.totalorder %s83, %s97
    %p99 = scmp.eq.s32.totalorder %s17, 0
    %p100 = por %p98, %p99
    %s102 = sadd.s32 %s101, 1
    %p105 = scmp.eq.s32.totalorder %s11, 1
    %p106 = scmp.ne.s32.totalorder %s101, %s103
    %p107 = scmp.eq.s32.totalorder %s11, 0
    %p108 = por %p106, %p107
    %p109 = scmp.ne.s32.totalorder %s101, %s103
    %p110 = scmp.eq.s32.totalorder %s16, 1
    %p111 = por %p109, %p110
    %p112 = scmp.ne.s32.totalorder %s103, %s104
    %p113 = scmp.eq.s32.totalorder %s16, 0
    %p114 = por %p112, %p113
    %p115 = scmp.ne.s32.totalorder %s103, %s104
    %p116 = scmp.eq.s32.totalorder %s17, 1
    %p117 = por %p115, %p116
    %p119 = scmp.ne.s32.totalorder %s104, %s118
    %p120 = scmp.eq.s32.totalorder %s17, 0
    %p121 = por %p119, %p120
    %s123 = sadd.s32 %s122, 1
    %p126 = scmp.eq.s32.totalorder %s11, 1
    %p127 = scmp.ne.s32.totalorder %s122, %s124
    %p128 = scmp.eq.s32.totalorder %s11, 0
    %p129 = por %p127, %p128
    %p130 = scmp.ne.s32.totalorder %s122, %s124
    %p131 = scmp.eq.s32.totalorder %s16, 1
    %p132 = por %p130, %p131
    %p133 = scmp.ne.s32.totalorder %s124, %s125
    %p134 = scmp.eq.s32.totalorder %s16, 0
    %p135 = por %p133, %p134
    %p136 = scmp.ne.s32.totalorder %s124, %s125
    %p137 = scmp.eq.s32.totalorder %s17, 1
    %p138 = por %p136, %p137
    %p140 = scmp.ne.s32.totalorder %s125, %s139
    %p141 = scmp.eq.s32.totalorder %s17, 0
    %p142 = por %p140, %p141
    %s143 = ssub.s32 %s18, %s30
    %s144 = ssub.s32 %s19, %s26
    %s145 = sor.u32 %s143, %s144
    %p146 = scmp.eq.s32.totalorder %s145, 0
    %s148 = sadd.s32 %s147, 1
    %s149 = scalar_select %p146, %s147, %s148
    %p152 = pneg %p146
    %p153 = scmp.eq.s32.totalorder %s11, 1
    %p154 = por %p152, %p153
    %p155 = scmp.ne.s32.totalorder %s147, %s150
    %p156 = scmp.eq.s32.totalorder %s11, 0
    %p157 = por %p155, %p156
    %p158 = scmp.ne.s32.totalorder %s147, %s150
    %p159 = scmp.eq.s32.totalorder %s16, 1
    %p160 = por %p158, %p159
    %p161 = scmp.ne.s32.totalorder %s150, %s151
    %p162 = scmp.eq.s32.totalorder %s16, 0
    %p163 = por %p161, %p162
    %p164 = scmp.ne.s32.totalorder %s150, %s151
    %p165 = scmp.eq.s32.totalorder %s17, 1
    %p166 = por %p164, %p165
    %p168 = scmp.ne.s32.totalorder %s151, %s167
    %p169 = scmp.eq.s32.totalorder %s17, 0
    %p170 = por %p168, %p169
    %p171 = scmp.le.s32.totalorder 1, %s11
    %p172 = scmp.lt.s32.totalorder %s11, 3
    %p173 = pnand %p171, %p172
    %p174 = pneg %p173
    // Predicated region
    $region9: #{conv_encoder_forward.5} parent=5 // pred_check
      _
    $region10: #{conv_encoder_forward.5} parent=5 // pred_check_branch
      %176 = sbr.rel (%p173) target = $region12
    $region11: #{conv_encoder_forward.5} parent=5 // pred_region
      %s177 = ssub.s32 %s11, 1
      // Predicated region
      $region13: #{conv_encoder_forward.5} parent=11 // pred_check
        %p178 = pneg %p72
      $region14: #{conv_encoder_forward.5} parent=11 // pred_check_branch
        %180 = sbr.rel (%p178) target = $region16
      $region15: #{conv_encoder_forward.5} parent=11 // pred_region
        _
      $region16: #{conv_encoder_forward.5} parent=11 // pred_fallthru
        _
      // Predicated region
      $region17: #{conv_encoder_forward.5} parent=11 // pred_check
        %p181 = pneg %p93
      $region18: #{conv_encoder_forward.5} parent=11 // pred_check_branch
        %183 = sbr.rel (%p181) target = $region20
      $region19: #{conv_encoder_forward.5} parent=11 // pred_region
        _
      $region20: #{conv_encoder_forward.5} parent=11 // pred_fallthru
        _
      // Predicated region
      $region21: #{conv_encoder_forward.5} parent=11 // pred_check
        %p184 = pneg %p114
      $region22: #{conv_encoder_forward.5} parent=11 // pred_check_branch
        %186 = sbr.rel (%p184) target = $region24
      $region23: #{conv_encoder_forward.5} parent=11 // pred_region
        _
      $region24: #{conv_encoder_forward.5} parent=11 // pred_fallthru
        _
      // Predicated region
      $region25: #{conv_encoder_forward.5} parent=11 // pred_check
        %p187 = pneg %p135
      $region26: #{conv_encoder_forward.5} parent=11 // pred_check_branch
        %189 = sbr.rel (%p187) target = $region28
      $region27: #{conv_encoder_forward.5} parent=11 // pred_region
        _
      $region28: #{conv_encoder_forward.5} parent=11 // pred_fallthru
        _
    $region12: #{conv_encoder_forward.5} parent=5 // pred_fallthru
      _
    %p190 = scmp.lt.s32.totalorder %s11, 2
    // Predicated region
    $region29: #{conv_encoder_forward.5} parent=5 // pred_check
      %p191 = pneg %p190
    $region30: #{conv_encoder_forward.5} parent=5 // pred_check_branch
      %193 = sbr.rel (%p191) target = $region32
    $region31: #{conv_encoder_forward.5} parent=5 // pred_region
      // Predicated region
      $region33: #{conv_encoder_forward.5} parent=31 // pred_check
        %p194 = pneg %p45
      $region34: #{conv_encoder_forward.5} parent=31 // pred_check_branch
        %196 = sbr.rel (%p194) target = $region36
      $region35: #{conv_encoder_forward.5} parent=31 // pred_region
        %s197 = smul.u32 2, %s19
        %p198 = scmp.lt.s32.totalorder %s18, 1
        %s199 = scalar_select %p198, %s18, 1
        %p200 = scmp.lt.s32.totalorder %s197, 1
        %s201 = scalar_select %p200, %s197, 1
        %s202 = smul.addr %s199, 2
        %s203 = sadd.s32 %s201, %s202
        %s204 = smul.addr %s203, 4
        %s205 = scalar_lea.vmem %s0, %s204
        %s206 = smul.u32 2, %s19
      $region36: #{conv_encoder_forward.5} parent=31 // pred_fallthru
        _
    $region32: #{conv_encoder_forward.5} parent=5 // pred_fallthru
      _
    %p207 = scmp.le.s32.totalorder 1, %s11
    %p208 = scmp.lt.s32.totalorder %s11, 3
    %p209 = pnand %p207, %p208
    %p210 = pneg %p209
    // Predicated region
    $region37: #{conv_encoder_forward.5} parent=5 // pred_check
      _
    $region38: #{conv_encoder_forward.5} parent=5 // pred_check_branch
      %212 = sbr.rel (%p209) target = $region40
    $region39: #{conv_encoder_forward.5} parent=5 // pred_region
      %s213 = ssub.s32 %s11, 1
      %s214 = smul.u32 2, %s21
      %p215 = scmp.lt.s32.totalorder %s20, 1
      %s216 = scalar_select %p215, %s20, 1
      %p217 = scmp.lt.s32.totalorder %s214, 1
      %s218 = scalar_select %p217, %s214, 1
      %s219 = smul.addr %s216, 2
      %s220 = sadd.s32 %s218, %s219
      %s221 = smul.addr %s220, 4
      %s222 = scalar_lea.vmem %s0, %s221
      %p223 = pneg %p51
      %p224 = pneg %p48
      %p225 = pneg %p72
      %p226 = pneg %p69
      %p227 = pneg %p93
      %p228 = pneg %p90
      %p229 = pneg %p114
      %p230 = pneg %p111
      %p231 = pneg %p135
      %p232 = pneg %p132
      %p233 = pneg %p163
      %p234 = pneg %p160
      %s235 = smul.u32 2, %s21
      %p236 = scmp.lt.s32.totalorder %s20, 1
      %s237 = scalar_select %p236, %s20, 1
      %p238 = scmp.lt.s32.totalorder %s235, 1
      %s239 = scalar_select %p238, %s235, 1
      %s240 = smul.addr %s237, 2
      %s241 = sadd.s32 %s239, %s240
      %s242 = smul.addr %s241, 4
      %s243 = scalar_lea.vmem %s5, %s242
      %s244 = smul.u32 2, %s21
      %p245 = scmp.lt.s32.totalorder %s20, 1
      %s246 = scalar_select %p245, %s20, 1
      %p247 = scmp.lt.s32.totalorder %s244, 1
      %s248 = scalar_select %p247, %s244, 1
      %s249 = smul.addr %s246, 2
      %s250 = sadd.s32 %s248, %s249
      %s251 = smul.addr %s250, 4
      %s252 = scalar_lea.vmem %s0, %s251
      %s253 = smul.u32 2, %s21
      %s254 = smul.u32 2, %s21
      %p255 = scmp.lt.s32.totalorder %s20, 1
      %s256 = scalar_select %p255, %s20, 1
      %p257 = scmp.lt.s32.totalorder %s254, 1
      %s258 = scalar_select %p257, %s254, 1
      %s259 = smul.addr %s256, 2
      %s260 = sadd.s32 %s258, %s259
      %s261 = smul.addr %s260, 4
      %s262 = scalar_lea.vmem %s5, %s261
      %s263 = smul.u32 2, %s21
      %v264 = vld [vmem:[%s252] sm:$0xff]
      %v265 = vld [vmem:[%s1] sm:$0xff]
      %v266 = vld [vmem:[%s1 + $0x8] sm:$0xff]
      %v267 = vld [vmem:[%s1 + $0x10] sm:$0xff]
      %v268 = vld [vmem:[%s1 + $0x18] sm:$0xff]
      %v269 = vld [vmem:[%s1 + $0x20] sm:$0xff]
      %v270 = vld [vmem:[%s1 + $0x28] sm:$0xff]
      %v271 = vld [vmem:[%s1 + $0x30] sm:$0xff]
      %v272 = vld [vmem:[%s1 + $0x38] sm:$0xff]
      %v273 = vld [vmem:[%s2] sm:$0xff]
      %v274 = vld [vmem:[%s2 + $0x8] sm:$0xff]
      %v275 = vld [vmem:[%s2 + $0x10] sm:$0xff]
      %v276 = vld [vmem:[%s2 + $0x18] sm:$0xff]
      %v277 = vld [vmem:[%s2 + $0x20] sm:$0xff]
      %v278 = vld [vmem:[%s2 + $0x28] sm:$0xff]
      %v279 = vld [vmem:[%s2 + $0x30] sm:$0xff]
      %v280 = vld [vmem:[%s2 + $0x38] sm:$0xff]
      %282 = vset.pattern.permute.xlu0 0
      %283 = vperm.xlu0 %282, %v273
      %v284 = vpop.permute.xlu0 %283
      %287 = vset.pattern.permute.xlu0 0
      %288 = vperm.xlu0 %287, %v274
      %v289 = vpop.permute.xlu0 %288
      %292 = vset.pattern.permute.xlu0 0
      %293 = vperm.xlu0 %292, %v275
      %v294 = vpop.permute.xlu0 %293
      %297 = vset.pattern.permute.xlu0 0
      %298 = vperm.xlu0 %297, %v276
      %v299 = vpop.permute.xlu0 %298
      %302 = vset.pattern.permute.xlu0 0
      %303 = vperm.xlu0 %302, %v277
      %v304 = vpop.permute.xlu0 %303
      %307 = vset.pattern.permute.xlu0 0
      %308 = vperm.xlu0 %307, %v278
      %v309 = vpop.permute.xlu0 %308
      %312 = vset.pattern.permute.xlu0 0
      %313 = vperm.xlu0 %312, %v279
      %v314 = vpop.permute.xlu0 %313
      %317 = vset.pattern.permute.xlu0 0
      %318 = vperm.xlu0 %317, %v280
      %v319 = vpop.permute.xlu0 %318
      %v322 = vcombine.high %v264, %v264
      %vm323 = vcmask 31744
      %v325 = vsel %vm323, %v265, 0
      %v328 = vsel %vm323, %v266, 0
      %v331 = vsel %vm323, %v267, 0
      %v334 = vsel %vm323, %v268, 0
      %v337 = vsel %vm323, %v269, 0
      %v340 = vsel %vm323, %v270, 0
      %v343 = vsel %vm323, %v271, 0
      %v346 = vsel %vm323, %v272, 0
      %vm348 = vcmask 1043456
      %v349 = vsel %vm348, %v264, 0
      %v351 = vsel %vm348, %v322, 0
      %353 = vmatprep.subr.mxu0 %v351
      %354 = vmatpush1.msra.mxu0 %v349
      %355 = vmatprep.subr.mxu0 0.0
      %356 = vmatpush1.msra.mxu0 0.0
      %357 = vmatprep.subr.mxu0 0.0
      %358 = vmatpush1.msra.mxu0 0.0
      %359 = vmatprep.subr.mxu0 0.0
      %360 = vmatpush1.msra.mxu0 0.0
      %361 = vmatprep.subr.mxu0 0.0
      %362 = vmatpush1.msra.mxu0 0.0
      %363 = vmatprep.subr.mxu0 0.0
      %364 = vmatpush1.msra.mxu0 0.0
      %365 = vmatprep.subr.mxu0 0.0
      %366 = vmatpush1.msra.mxu0 0.0
      %367 = vmatprep.subr.mxu0 0.0
      %368 = vmatpush1.msra.mxu0 0.0
      %369 = vmatprep.subr.mxu0 0.0
      %370 = vmatpush1.msra.mxu0 0.0
      %371 = vmatprep.subr.mxu0 0.0
      %372 = vmatpush1.msra.mxu0 0.0
      %373 = vmatprep.subr.mxu0 0.0
      %374 = vmatpush1.msra.mxu0 0.0
      %375 = vmatprep.subr.mxu0 0.0
      %376 = vmatpush1.msra.mxu0 0.0
      %377 = vmatprep.subr.mxu0 0.0
      %378 = vmatpush1.msra.mxu0 0.0
      %379 = vmatprep.subr.mxu0 0.0
      %380 = vmatpush1.msra.mxu0 0.0
      %381 = vmatprep.subr.mxu0 0.0
      %382 = vmatpush1.msra.mxu0 0.0
      %383 = vmatprep.subr.mxu0 0.0
      %384 = vmatpush1.msra.mxu0 0.0
      %385 = vmatprep.subr.mxu0 0.0
      %386 = vmatpush1.msra.mxu0 0.0
      %387 = vmatprep.subr.mxu0 0.0
      %388 = vmatpush1.msra.mxu0 0.0
      %389 = vmatprep.subr.mxu0 0.0
      %390 = vmatpush1.msra.mxu0 0.0
      %391 = vmatprep.subr.mxu0 0.0
      %392 = vmatpush1.msra.mxu0 0.0
      %393 = vmatprep.subr.mxu0 0.0
      %394 = vmatpush1.msra.mxu0 0.0
      %395 = vmatprep.subr.mxu0 0.0
      %396 = vmatpush1.msra.mxu0 0.0
      %397 = vmatprep.subr.mxu0 0.0
      %398 = vmatpush1.msra.mxu0 0.0
      %399 = vmatprep.subr.mxu0 0.0
      %400 = vmatpush1.msra.mxu0 0.0
      %401 = vmatprep.subr.mxu0 0.0
      %402 = vmatpush1.msra.mxu0 0.0
      %403 = vmatprep.subr.mxu0 0.0
      %404 = vmatpush1.msra.mxu0 0.0
      %405 = vmatprep.subr.mxu0 0.0
      %406 = vmatpush1.msra.mxu0 0.0
      %407 = vmatprep.subr.mxu0 0.0
      %408 = vmatpush1.msra.mxu0 0.0
      %409 = vmatprep.subr.mxu0 0.0
      %410 = vmatpush1.msra.mxu0 0.0
      %411 = vmatprep.subr.mxu0 0.0
      %412 = vmatpush1.msra.mxu0 0.0
      %413 = vmatprep.subr.mxu0 0.0
      %414 = vmatpush1.msra.mxu0 0.0
      %415 = vmatprep.subr.mxu0 0.0
      %416 = vmatpush1.msra.mxu0 0.0
      %417 = vmatprep.mubr.f32.mxu0 0.0
      %418 = vmatmul.mubr.f32.gmra.mrb[0].mxu0 %v325
      %v419 = vpop.f32.mrb[0].mxu0
      %v420 = vadd.f32 %v284, %v419
      %v421 = vpop.f32.mrb[0].mxu0
      %v422 = vadd.f32 %v284, %v421
      %423 = vmatprep.mubr.f32.mxu0 0.0
      %424 = vmatmul.mubr.f32.gmra.mrb[0].mxu0 %v328
      %v425 = vpop.f32.mrb[0].mxu0
      %v426 = vadd.f32 %v289, %v425
      %v427 = vpop.f32.mrb[0].mxu0
      %v428 = vadd.f32 %v289, %v427
      %429 = vmatprep.mubr.f32.mxu0 0.0
      %430 = vmatmul.mubr.f32.gmra.mrb[0].mxu0 %v331
      %v431 = vpop.f32.mrb[0].mxu0
      %v432 = vadd.f32 %v294, %v431
      %v433 = vpop.f32.mrb[0].mxu0
      %v434 = vadd.f32 %v294, %v433
      %435 = vmatprep.mubr.f32.mxu0 0.0
      %436 = vmatmul.mubr.f32.gmra.mrb[0].mxu0 %v334
      %v437 = vpop.f32.mrb[0].mxu0
      %v438 = vadd.f32 %v299, %v437
      %v439 = vpop.f32.mrb[0].mxu0
      %v440 = vadd.f32 %v299, %v439
      %441 = vmatprep.mubr.f32.mxu0 0.0
      %442 = vmatmul.mubr.f32.gmra.mrb[0].mxu0 %v337
      %v443 = vpop.f32.mrb[0].mxu0
      %v444 = vadd.f32 %v304, %v443
      %v445 = vpop.f32.mrb[0].mxu0
      %v446 = vadd.f32 %v304, %v445
      %447 = vmatprep.mubr.f32.mxu0 0.0
      %448 = vmatmul.mubr.f32.gmra.mrb[0].mxu0 %v340
      %v449 = vpop.f32.mrb[0].mxu0
      %v450 = vadd.f32 %v309, %v449
      %v451 = vpop.f32.mrb[0].mxu0
      %v452 = vadd.f32 %v309, %v451
      %453 = vmatprep.mubr.f32.mxu0 0.0
      %454 = vmatmul.mubr.f32.gmra.mrb[0].mxu0 %v343
      %v455 = vpop.f32.mrb[0].mxu0
      %v456 = vadd.f32 %v314, %v455
      %v457 = vpop.f32.mrb[0].mxu0
      %v458 = vadd.f32 %v314, %v457
      %459 = vmatprep.mubr.f32.mxu0 0.0
      %460 = vmatmul.mubr.f32.gmra.mrb[0].mxu0 %v346
      %v461 = vpop.f32.mrb[0].mxu0
      %v462 = vadd.f32 %v319, %v461
      %v463 = vpop.f32.mrb[0].mxu0
      %v464 = vadd.f32 %v319, %v463
      %465 = vdwg.mxu0
      %v466 = vsub.f32 0.0, %v420
      %v467 = vsub.f32 0.0, %v422
      %v468 = vsub.f32 0.0, %v426
      %v469 = vsub.f32 0.0, %v428
      %v470 = vsub.f32 0.0, %v432
      %v471 = vsub.f32 0.0, %v434
      %v472 = vsub.f32 0.0, %v438
      %v473 = vsub.f32 0.0, %v440
      %v474 = vsub.f32 0.0, %v444
      %v475 = vsub.f32 0.0, %v446
      %v476 = vsub.f32 0.0, %v450
      %v477 = vsub.f32 0.0, %v452
      %v478 = vsub.f32 0.0, %v456
      %v479 = vsub.f32 0.0, %v458
      %v480 = vsub.f32 0.0, %v462
      %v481 = vsub.f32 0.0, %v464
      %v482 = vmul.f32 %v466, 1.442695
      %v483 = vpow.pop %v482
      %v484 = vmul.f32 %v467, 1.442695
      %v485 = vpow.pop %v484
      %v486 = vmul.f32 %v468, 1.442695
      %v487 = vpow.pop %v486
      %v488 = vmul.f32 %v469, 1.442695
      %v489 = vpow.pop %v488
      %v490 = vmul.f32 %v470, 1.442695
      %v491 = vpow.pop %v490
      %v492 = vmul.f32 %v471, 1.442695
      %v493 = vpow.pop %v492
      %v494 = vmul.f32 %v472, 1.442695
      %v495 = vpow.pop %v494
      %v496 = vmul.f32 %v473, 1.442695
      %v497 = vpow.pop %v496
      %v498 = vmul.f32 %v474, 1.442695
      %v499 = vpow.pop %v498
      %v500 = vmul.f32 %v475, 1.442695
      %v501 = vpow.pop %v500
      %v502 = vmul.f32 %v476, 1.442695
      %v503 = vpow.pop %v502
      %v504 = vmul.f32 %v477, 1.442695
      %v505 = vpow.pop %v504
      %v506 = vmul.f32 %v478, 1.442695
      %v507 = vpow.pop %v506
      %v508 = vmul.f32 %v479, 1.442695
      %v509 = vpow.pop %v508
      %v510 = vmul.f32 %v480, 1.442695
      %v511 = vpow.pop %v510
      %v512 = vmul.f32 %v481, 1.442695
      %v513 = vpow.pop %v512
      %v514 = vadd.f32 %v483, 1.0
      %v515 = vadd.f32 %v485, 1.0
      %v516 = vadd.f32 %v487, 1.0
      %v517 = vadd.f32 %v489, 1.0
      %v518 = vadd.f32 %v491, 1.0
      %v519 = vadd.f32 %v493, 1.0
      %v520 = vadd.f32 %v495, 1.0
      %v521 = vadd.f32 %v497, 1.0
      %v522 = vadd.f32 %v499, 1.0
      %v523 = vadd.f32 %v501, 1.0
      %v524 = vadd.f32 %v503, 1.0
      %v525 = vadd.f32 %v505, 1.0
      %v526 = vadd.f32 %v507, 1.0
      %v527 = vadd.f32 %v509, 1.0
      %v528 = vadd.f32 %v511, 1.0
      %v529 = vadd.f32 %v513, 1.0
      %v530 = vrcp.pop %v514
      %v531 = vmul.f32 1.0, %v530
      %v532 = vrcp.pop %v515
      %v533 = vmul.f32 1.0, %v532
      %v534 = vrcp.pop %v516
      %v535 = vmul.f32 1.0, %v534
      %v536 = vrcp.pop %v517
      %v537 = vmul.f32 1.0, %v536
      %v538 = vrcp.pop %v518
      %v539 = vmul.f32 1.0, %v538
      %v540 = vrcp.pop %v519
      %v541 = vmul.f32 1.0, %v540
      %v542 = vrcp.pop %v520
      %v543 = vmul.f32 1.0, %v542
      %v544 = vrcp.pop %v521
      %v545 = vmul.f32 1.0, %v544
      %v546 = vrcp.pop %v522
      %v547 = vmul.f32 1.0, %v546
      %v548 = vrcp.pop %v523
      %v549 = vmul.f32 1.0, %v548
      %v550 = vrcp.pop %v524
      %v551 = vmul.f32 1.0, %v550
      %v552 = vrcp.pop %v525
      %v553 = vmul.f32 1.0, %v552
      %v554 = vrcp.pop %v526
      %v555 = vmul.f32 1.0, %v554
      %v556 = vrcp.pop %v527
      %v557 = vmul.f32 1.0, %v556
      %v558 = vrcp.pop %v528
      %v559 = vmul.f32 1.0, %v558
      %v560 = vrcp.pop %v529
      %v561 = vmul.f32 1.0, %v560
      %v562 = vmul.f32 %v420, %v531
      %v563 = vmul.f32 %v422, %v533
      %v564 = vmul.f32 %v426, %v535
      %v565 = vmul.f32 %v428, %v537
      %v566 = vmul.f32 %v432, %v539
      %v567 = vmul.f32 %v434, %v541
      %v568 = vmul.f32 %v438, %v543
      %v569 = vmul.f32 %v440, %v545
      %v570 = vmul.f32 %v444, %v547
      %v571 = vmul.f32 %v446, %v549
      %v572 = vmul.f32 %v450, %v551
      %v573 = vmul.f32 %v452, %v553
      %v574 = vmul.f32 %v456, %v555
      %v575 = vmul.f32 %v458, %v557
      %v576 = vmul.f32 %v462, %v559
      %v577 = vmul.f32 %v464, %v561
      %v578 = vld [vmem:[%s3] sm:$0x7]
      %v579 = vld [vmem:[%s4] sm:$0x7]
      %581 = vset.pattern.permute.xlu0 0
      %582 = vperm.xlu0 %581, %v579
      %v583 = vpop.permute.xlu0 %582
      %vm585 = vcmask 523264
      %v587 = vsel %vm585, %v578, 0
      %589 = vmatprep.subr.mxu0 %v563
      %590 = vmatpush1.msra.mxu0 %v562
      %591 = vmatprep.subr.mxu0 %v565
      %592 = vmatpush1.msra.mxu0 %v564
      %593 = vmatprep.subr.mxu0 %v567
      %594 = vmatpush1.msra.mxu0 %v566
      %595 = vmatprep.subr.mxu0 %v569
      %596 = vmatpush1.msra.mxu0 %v568
      %597 = vmatprep.subr.mxu0 %v571
      %598 = vmatpush1.msra.mxu0 %v570
      %599 = vmatprep.subr.mxu0 %v573
      %600 = vmatpush1.msra.mxu0 %v572
      %601 = vmatprep.subr.mxu0 %v575
      %602 = vmatpush1.msra.mxu0 %v574
      %603 = vmatprep.subr.mxu0 %v577
      %604 = vmatpush1.msra.mxu0 %v576
      %605 = vmatprep.subr.mxu0 0.0
      %606 = vmatpush1.msra.mxu0 0.0
      %607 = vmatprep.subr.mxu0 0.0
      %608 = vmatpush1.msra.mxu0 0.0
      %609 = vmatprep.subr.mxu0 0.0
      %610 = vmatpush1.msra.mxu0 0.0
      %611 = vmatprep.subr.mxu0 0.0
      %612 = vmatpush1.msra.mxu0 0.0
      %613 = vmatprep.subr.mxu0 0.0
      %614 = vmatpush1.msra.mxu0 0.0
      %615 = vmatprep.subr.mxu0 0.0
      %616 = vmatpush1.msra.mxu0 0.0
      %617 = vmatprep.subr.mxu0 0.0
      %618 = vmatpush1.msra.mxu0 0.0
      %619 = vmatprep.subr.mxu0 0.0
      %620 = vmatpush1.msra.mxu0 0.0
      %621 = vmatprep.subr.mxu0 0.0
      %622 = vmatpush1.msra.mxu0 0.0
      %623 = vmatprep.subr.mxu0 0.0
      %624 = vmatpush1.msra.mxu0 0.0
      %625 = vmatprep.subr.mxu0 0.0
      %626 = vmatpush1.msra.mxu0 0.0
      %627 = vmatprep.subr.mxu0 0.0
      %628 = vmatpush1.msra.mxu0 0.0
      %629 = vmatprep.subr.mxu0 0.0
      %630 = vmatpush1.msra.mxu0 0.0
      %631 = vmatprep.subr.mxu0 0.0
      %632 = vmatpush1.msra.mxu0 0.0
      %633 = vmatprep.subr.mxu0 0.0
      %634 = vmatpush1.msra.mxu0 0.0
      %635 = vmatprep.subr.mxu0 0.0
      %636 = vmatpush1.msra.mxu0 0.0
      %637 = vmatprep.subr.mxu0 0.0
      %638 = vmatpush1.msra.mxu0 0.0
      %639 = vmatprep.subr.mxu0 0.0
      %640 = vmatpush1.msra.mxu0 0.0
      %641 = vmatprep.subr.mxu0 0.0
      %642 = vmatpush1.msra.mxu0 0.0
      %643 = vmatprep.subr.mxu0 0.0
      %644 = vmatpush1.msra.mxu0 0.0
      %645 = vmatprep.subr.mxu0 0.0
      %646 = vmatpush1.msra.mxu0 0.0
      %647 = vmatprep.subr.mxu0 0.0
      %648 = vmatpush1.msra.mxu0 0.0
      %649 = vmatprep.subr.mxu0 0.0
      %650 = vmatpush1.msra.mxu0 0.0
      %651 = vmatprep.subr.mxu0 0.0
      %652 = vmatpush1.msra.mxu0 0.0
      %653 = vmatprep.mubr.f32.mxu0 0.0
      %654 = vmatmul.mubr.f32.gmra.mrb[0].mxu0 %v587
      %v655 = vpop.f32.mrb[0].mxu0
      %v656 = vadd.f32 %v583, %v655
      %v657 = vpop.f32.mrb[0].mxu0
      %v658 = vadd.f32 %v583, %v657
      %659 = vdwg.mxu0
      %v662 = vcombine.low %v656, %v658
      %664 = vst [vmem:[%s262] sm:$0x77] %v662
      %s665 = smul.u32 2, %s21
      %p666 = scmp.lt.s32.totalorder %s20, 1
      %s667 = scalar_select %p666, %s20, 1
      %p668 = scmp.lt.s32.totalorder %s665, 1
      %s669 = scalar_select %p668, %s665, 1
      %s670 = smul.addr %s667, 2
      %s671 = sadd.s32 %s669, %s670
      %s672 = smul.addr %s671, 4
      %s673 = scalar_lea.vmem %s5, %s672
      // Predicated region
      $region41: #{conv_encoder_forward.5} parent=39 // pred_check
        %p674 = pneg %p160
      $region42: #{conv_encoder_forward.5} parent=39 // pred_check_branch
        %676 = sbr.rel (%p674) target = $region44
      $region43: #{conv_encoder_forward.5} parent=39 // pred_region
        %s677 = smul.u32 2, %s21
      $region44: #{conv_encoder_forward.5} parent=39 // pred_fallthru
        _
    $region40: #{conv_encoder_forward.5} parent=5 // pred_fallthru
      _
    %p678 = scmp.le.s32.totalorder 2, %s11
    // Predicated region
    $region45: #{conv_encoder_forward.5} parent=5 // pred_check
      %p679 = pneg %p678
    $region46: #{conv_encoder_forward.5} parent=5 // pred_check_branch
      %681 = sbr.rel (%p679) target = $region48
    $region47: #{conv_encoder_forward.5} parent=5 // pred_region
      %s682 = ssub.s32 %s11, 2
      // Predicated region
      $region49: #{conv_encoder_forward.5} parent=47 // pred_check
        %p683 = pneg %p166
      $region50: #{conv_encoder_forward.5} parent=47 // pred_check_branch
        %685 = sbr.rel (%p683) target = $region52
      $region51: #{conv_encoder_forward.5} parent=47 // pred_region
        %s686 = smul.u32 2, %s23
        %p687 = scmp.lt.s32.totalorder %s22, 1
        %s688 = scalar_select %p687, %s22, 1
        %p689 = scmp.lt.s32.totalorder %s686, 1
        %s690 = scalar_select %p689, %s686, 1
        %s691 = smul.addr %s688, 2
        %s692 = sadd.s32 %s690, %s691
        %s693 = smul.addr %s692, 4
        %s694 = scalar_lea.vmem %s5, %s693
      $region52: #{conv_encoder_forward.5} parent=47 // pred_fallthru
        _
    $region48: #{conv_encoder_forward.5} parent=5 // pred_fallthru
      _
  $region6: #{conv_encoder_forward.5} parent=0 // loop_footer
    %s15 = sadd.s32 1, %s11
  $region7: #{conv_encoder_forward.5} parent=0 // loop_footer_branch
    %10 = sbr.rel target = $region3
  $region8: #{conv_encoder_forward.5} parent=0 // loop_exit
    _

</llo_original>
